<compile_context>
chip_gen: v5e
topology: v5e:2x2
jax: 0.10.0
libtpu: 0.0.40
codegen_flags: <defaults>
</compile_context>

<pallas_src>
import math

import jax
import jax.numpy as jnp
from jax import lax
from jax.experimental import pallas as pl
from jax.experimental.pallas import tpu as pltpu

# ---------------- model config (small, consistent with the module's defaults scaled down) ----
B = 2        # batch
L = 8        # sequence length
DMODEL = 32  # model dim
H = 4        # heads
DK = 8       # key dim per head
DV = 8       # value dim per head
DFF = 64     # feed-forward hidden dim
LN_EPS = 1e-5
BL = B * L

# ---------------- packed weight slab layout (one DMA for all parameters) ----------------------
# All row offsets are multiples of 8 (sublane aligned); columns are left-justified in a
# 128-lane-wide slab so every slice is a single lane tile.
ROW_QKV_M = 0      # (32, 96)  fused [Q | K | V] per-head weights, masked self-attention
ROW_WO_M = 32      # (32, 32)  output projection, masked self-attention
ROW_WQ_C = 64      # (32, 32)  fused Q per-head weights, cross attention
ROW_WKV_C = 96     # (32, 64)  fused [K | V] per-head weights, cross attention
ROW_WO_C = 128     # (32, 32)  output projection, cross attention
ROW_W1 = 160       # (32, 64)  feed-forward linear 1
ROW_W2 = 192       # (64, 32)  feed-forward linear 2
ROW_B1 = 256       # (1, 64)   feed-forward bias 1
ROW_B2 = 264       # (1, 32)   feed-forward bias 2
W_ROWS = 272
W_COLS = 128


# ---------------- Pallas kernel: the whole decoder block in one grid step --------------------
def _decoder_block_kernel(x_ref, w_ref, out_ref):
  x_enc = x_ref[0]   # (B, L, D)
  x_dec = x_ref[1]   # (B, L, D)

  # Static slices of the packed weight slab (zero-cost views, one DMA upstream).
  w_qkv_m = w_ref[ROW_QKV_M:ROW_QKV_M + DMODEL, 0:3 * H * DK]   # (32, 96)
  wo_m = w_ref[ROW_WO_M:ROW_WO_M + H * DV, 0:DMODEL]            # (32, 32)
  w_q_c = w_ref[ROW_WQ_C:ROW_WQ_C + DMODEL, 0:H * DK]           # (32, 32)
  w_kv_c = w_ref[ROW_WKV_C:ROW_WKV_C + DMODEL, 0:H * (DK + DV)] # (32, 64)
  wo_c = w_ref[ROW_WO_C:ROW_WO_C + H * DV, 0:DMODEL]            # (32, 32)
  w1 = w_ref[ROW_W1:ROW_W1 + DMODEL, 0:DFF]                     # (32, 64)
  w2 = w_ref[ROW_W2:ROW_W2 + DFF, 0:DMODEL]                     # (64, 32)
  b1 = w_ref[ROW_B1:ROW_B1 + 1, 0:DFF]                          # (1, 64)
  b2 = w_ref[ROW_B2:ROW_B2 + 1, 0:DMODEL]                       # (1, 32)

  def layernorm(x):
    # LayerNorm over the entire (L, D) slab per batch element, no affine params.
    # Nested means equal the joint (L, D) mean because group sizes are uniform.
    mu = jnp.mean(jnp.mean(x, axis=2, keepdims=True), axis=1, keepdims=True)
    xc = x - mu
    var = jnp.mean(jnp.mean(xc * xc, axis=2, keepdims=True), axis=1, keepdims=True)
    return xc * lax.rsqrt(var + LN_EPS)

  def fast_recip(x):
    # EUP approx reciprocal + one Newton step -> ~f32 accuracy, divide stays off the VPU.
    r = pl.reciprocal(x, approx=True)
    return r * (2.0 - x * r)

  inv_sqrt_dk = jnp.float32(1.0 / math.sqrt(DK))
  neg_inf = jnp.float32(-jnp.inf)
  # Causal mask hoisted once, shared by every (head, batch) slice of the z axis.
  rowi = lax.broadcasted_iota(jnp.int32, (1, L, L), 1)
  coli = lax.broadcasted_iota(jnp.int32, (1, L, L), 2)
  causal = coli > rowi                      # strictly upper triangular -> -inf

  def heads_to_batch(proj, col0, dh):
    # proj: (B*L, C). Slice per-head lanes and fold heads onto the leading axis:
    # result (H*B, L, dh), z = h*B + b.  Only lane slices + major-axis concat (cheap).
    return jnp.concatenate(
        [proj[:, col0 + h * dh: col0 + (h + 1) * dh].reshape(B, L, dh)
         for h in range(H)], axis=0)

  def batch_to_lanes(att):
    # att: (H*B, L, DV) -> (B*L, H*DV), heads head-major along lanes (matches Wo rows).
    return jnp.concatenate(
        [att[h * B:(h + 1) * B].reshape(BL, DV) for h in range(H)], axis=-1)

  def attention(q, k, v, masked):
    # q/k/v: (H*B, L, dh). One batched score matmul, ONE fused softmax over all
    # heads & batches, one batched PV matmul.
    # NOTE: 'zqd,zkd->zqk' contracts the trailing dim of both operands; at DK=L=8 the
    # implied K-side transpose is a handful of tiny XLU ops (verify in bundle dump if
    # this ever grows).
    s = jnp.einsum('zqd,zkd->zqk', q, k,
                   preferred_element_type=jnp.float32) * inv_sqrt_dk      # (H*B, L, L)
    if masked:
      s = jnp.where(causal, neg_inf, s)
    m = jnp.max(s, axis=-1, keepdims=True)
    e = jnp.exp(s - m)
    p = e * fast_recip(jnp.sum(e, axis=-1, keepdims=True))
    return jnp.einsum('zqk,zkd->zqd', p, v,
                      preferred_element_type=jnp.float32)                 # (H*B, L, DV)

  # ---- masked multi-head self-attention over normalized decoder input ----
  x_dec_n = layernorm(x_dec)
  qkv_m = jnp.dot(x_dec_n.reshape(BL, DMODEL), w_qkv_m,
                  preferred_element_type=jnp.float32)                     # (BL, 96)
  q = heads_to_batch(qkv_m, 0, DK)
  k = heads_to_batch(qkv_m, H * DK, DK)
  v = heads_to_batch(qkv_m, 2 * H * DK, DV)
  att1 = batch_to_lanes(attention(q, k, v, masked=True))                  # (BL, H*DV)
  att1 = jnp.dot(att1, wo_m,
                 preferred_element_type=jnp.float32).reshape(B, L, DMODEL)
  current = x_dec + att1                     # dropout == identity (eval)

  # ---- cross attention: K/V from normed encoder, Q from normed residual ----
  current_n = layernorm(current)
  x_enc_n = layernorm(x_enc)
  q_c = jnp.dot(current_n.reshape(BL, DMODEL), w_q_c,
                preferred_element_type=jnp.float32)                       # (BL, 32)
  kv_c = jnp.dot(x_enc_n.reshape(BL, DMODEL), w_kv_c,
                 preferred_element_type=jnp.float32)                      # (BL, 64)
  q = heads_to_batch(q_c, 0, DK)
  k = heads_to_batch(kv_c, 0, DK)
  v = heads_to_batch(kv_c, H * DK, DV)
  att2 = batch_to_lanes(attention(q, k, v, masked=False))
  att2 = jnp.dot(att2, wo_c,
                 preferred_element_type=jnp.float32).reshape(B, L, DMODEL)
  result = current + att2                    # dropout == identity (eval)

  # ---- position-wise feed-forward on the flattened (B*L, D) slab ----
  result_n = layernorm(result).reshape(BL, DMODEL)
  h1 = jnp.maximum(jnp.dot(result_n, w1, preferred_element_type=jnp.float32) + b1, 0.0)
  ff = jnp.dot(h1, w2, preferred_element_type=jnp.float32) + b2

  out_ref[...] = (result + ff.reshape(B, L, DMODEL)).astype(out_ref.dtype)


# ---------------- wrapper: pack inputs/weights, single-step pallas_call ----------------------
def _pack_weights(params):
  (wq_m, wk_m, wv_m, wo_m, wq_c, wk_c, wv_c, wo_c, w1, b1, w2, b2) = params
  # Per-head (H, D, Dh) -> head-major fused (D, H*Dh) so one wide matmul per projection.
  fuse = lambda w: jnp.transpose(w, (1, 0, 2)).reshape(DMODEL, -1)
  w_qkv_m = jnp.concatenate([fuse(wq_m), fuse(wk_m), fuse(wv_m)], axis=1)   # (32, 96)
  w_q_c = fuse(wq_c)                                                        # (32, 32)
  w_kv_c = jnp.concatenate([fuse(wk_c), fuse(wv_c)], axis=1)                # (32, 64)

  slab = jnp.zeros((W_ROWS, W_COLS), jnp.float32)
  put = lambda s, r, w: s.at[r:r + w.shape[0], :w.shape[1]].set(w)
  slab = put(slab, ROW_QKV_M, w_qkv_m)
  slab = put(slab, ROW_WO_M, wo_m)
  slab = put(slab, ROW_WQ_C, w_q_c)
  slab = put(slab, ROW_WKV_C, w_kv_c)
  slab = put(slab, ROW_WO_C, wo_c)
  slab = put(slab, ROW_W1, w1)
  slab = put(slab, ROW_W2, w2)
  slab = put(slab, ROW_B1, b1)
  slab = put(slab, ROW_B2, b2)
  return slab


def decoder_block(x_enc, x_dec, params):
  x_in = jnp.stack([x_enc, x_dec], axis=0)          # (2, B, L, D): one input DMA
  w_slab = _pack_weights(params)                    # (272, 128): one weight DMA

  out_bytes = B * L * DMODEL * 4
  bytes_accessed = x_in.size * 4 + w_slab.size * 4 + out_bytes
  cost = pl.CostEstimate(flops=450_000, transcendentals=1_200,
                         bytes_accessed=bytes_accessed)

  return pl.pallas_call(
      _decoder_block_kernel,
      out_shape=jax.ShapeDtypeStruct((B, L, DMODEL), jnp.float32),
      grid_spec=pltpu.PrefetchScalarGridSpec(
          num_scalar_prefetch=0,
          grid=(1,),                                    # single step: whole problem in VMEM
          in_specs=[
              pl.BlockSpec((2, B, L, DMODEL), lambda i: (0, 0, 0, 0)),
              pl.BlockSpec((W_ROWS, W_COLS), lambda i: (0, 0)),
          ],
          out_specs=pl.BlockSpec((B, L, DMODEL), lambda i: (0, 0, 0)),
      ),
      compiler_params=pltpu.CompilerParams(dimension_semantics=("arbitrary",)),
      cost_estimate=cost,
  )(x_in, w_slab)


# ---------------- pure-JAX reference (same math, original weight layout) ---------------------
def _reference(x_enc, x_dec, params):
  (wq_m, wk_m, wv_m, wo_m, wq_c, wk_c, wv_c, wo_c, w1, b1, w2, b2) = params

  def layernorm(x):  # per-sample over (L, D)
    mu = jnp.mean(x, axis=(1, 2), keepdims=True)
    var = jnp.mean((x - mu) ** 2, axis=(1, 2), keepdims=True)
    return (x - mu) / jnp.sqrt(var + LN_EPS)

  def mha(x_kv, x_q, wq, wk, wv, wo, masked):
    heads = []
    for i in range(H):
      q = x_q @ wq[i]
      k = x_kv @ wk[i]
      v = x_kv @ wv[i]
      s = jnp.einsum("bqd,bkd->bqk", q, k) / math.sqrt(DK)
      if masked:
        mask = jnp.triu(jnp.full((L, L), -jnp.inf), k=1)
        s = s + mask[None]
      p = jax.nn.softmax(s, axis=-1)
      heads.append(jnp.einsum("bqk,bkd->bqd", p, v))
    return jnp.concatenate(heads, axis=-1) @ wo

  x_dec_n = layernorm(x_dec)
  current = x_dec + mha(x_dec_n, x_dec_n, wq_m, wk_m, wv_m, wo_m, True)
  current_n = layernorm(current)
  x_enc_n = layernorm(x_enc)
  result = current + mha(x_enc_n, current_n, wq_c, wk_c, wv_c, wo_c, False)
  result_n = layernorm(result)
  ff = jnp.maximum(result_n @ w1 + b1[0], 0.0) @ w2 + b2[0]
  return result + ff


# ---------------- deterministic parameter construction ---------------------------------------
def _make_params(key):
  def uniform(key, shape, fan_in):
    bound = 1.0 / math.sqrt(fan_in)
    return jax.random.uniform(key, shape, jnp.float32, -bound, bound)

  ks = jax.random.split(key, 12)
  wq_m = uniform(ks[0], (H, DMODEL, DK), DMODEL)
  wk_m = uniform(ks[1], (H, DMODEL, DK), DMODEL)
  wv_m = uniform(ks[2], (H, DMODEL, DV), DMODEL)
  wo_m = uniform(ks[3], (H * DV, DMODEL), H * DV)
  wq_c = uniform(ks[4], (H, DMODEL, DK), DMODEL)
  wk_c = uniform(ks[5], (H, DMODEL, DK), DMODEL)
  wv_c = uniform(ks[6], (H, DMODEL, DV), DMODEL)
  wo_c = uniform(ks[7], (H * DV, DMODEL), H * DV)
  w1 = uniform(ks[8], (DMODEL, DFF), DMODEL)
  b1 = uniform(ks[9], (1, DFF), DMODEL)
  w2 = uniform(ks[10], (DFF, DMODEL), DFF)
  b2 = uniform(ks[11], (1, DMODEL), DFF)
  return (wq_m, wk_m, wv_m, wo_m, wq_c, wk_c, wv_c, wo_c, w1, b1, w2, b2)


if __name__ == "__main__":
  key = jax.random.PRNGKey(0)
  k_enc, k_dec, k_par = jax.random.split(key, 3)
  x_enc = jax.random.normal(k_enc, (B, L, DMODEL), jnp.float32)
  x_dec = jax.random.normal(k_dec, (B, L, DMODEL), jnp.float32)
  params = _make_params(k_par)

  out = jax.block_until_ready(decoder_block(x_enc, x_dec, params))
  ref = jax.block_until_ready(_reference(x_enc, x_dec, params))

  assert out.shape == (B, L, DMODEL)
  assert jnp.allclose(out, ref, atol=1e-4, rtol=1e-4), "mismatch vs reference"

  print("KERNEL_OK")
</pallas_src>

<mosaic_0001>
module attributes {stable_mosaic.version = 11 : i64} {
  func.func @_decoder_block_kernel(%arg0: i32, %arg1: memref<2x2x8x32xf32, #tpu.memory_space<vmem>>, %arg2: memref<272x128xf32, #tpu.memory_space<vmem>>, %arg3: memref<2x8x32xf32, #tpu.memory_space<vmem>>) attributes {dimension_semantics = [#tpu.dimension_semantics<arbitrary>], iteration_bounds = array<i64: 1>, scalar_prefetch = 0 : i64, scratch_operands = 0 : i64, tpu.core_type = #tpu.core_type<tc>, window_params = [{pipeline_mode = #tpu.pipeline_mode<synchronous>, transform_indices = @transform_0, window_bounds = array<i64: 2, 2, 8, 32>}, {pipeline_mode = #tpu.pipeline_mode<synchronous>, transform_indices = @transform_1, window_bounds = array<i64: 272, 128>}, {pipeline_mode = #tpu.pipeline_mode<synchronous>, transform_indices = @transform_2, window_bounds = array<i64: 2, 8, 32>}]} {
    %c0 = arith.constant 0 : index
    %c0_0 = arith.constant 0 : index
    %c0_1 = arith.constant 0 : index
    %c0_2 = arith.constant 0 : index
    %0 = vector.load %arg1[%c0, %c0_0, %c0_1, %c0_2] : memref<2x2x8x32xf32, #tpu.memory_space<vmem>>, vector<1x2x8x32xf32>
    %1 = vector.shape_cast %0 : vector<1x2x8x32xf32> to vector<2x8x32xf32>
    %c1 = arith.constant 1 : index
    %c0_3 = arith.constant 0 : index
    %c0_4 = arith.constant 0 : index
    %c0_5 = arith.constant 0 : index
    %2 = vector.load %arg1[%c1, %c0_3, %c0_4, %c0_5] : memref<2x2x8x32xf32, #tpu.memory_space<vmem>>, vector<1x2x8x32xf32>
    %3 = vector.shape_cast %2 : vector<1x2x8x32xf32> to vector<2x8x32xf32>
    %c0_6 = arith.constant 0 : index
    %c0_7 = arith.constant 0 : index
    %4 = vector.load %arg2[%c0_6, %c0_7] : memref<272x128xf32, #tpu.memory_space<vmem>>, vector<32x96xf32>
    %c32 = arith.constant 32 : index
    %c0_8 = arith.constant 0 : index
    %5 = vector.load %arg2[%c32, %c0_8] : memref<272x128xf32, #tpu.memory_space<vmem>>, vector<32x32xf32>
    %c64 = arith.constant 64 : index
    %c0_9 = arith.constant 0 : index
    %6 = vector.load %arg2[%c64, %c0_9] : memref<272x128xf32, #tpu.memory_space<vmem>>, vector<32x32xf32>
    %c96 = arith.constant 96 : index
    %c0_10 = arith.constant 0 : index
    %7 = vector.load %arg2[%c96, %c0_10] : memref<272x128xf32, #tpu.memory_space<vmem>>, vector<32x64xf32>
    %c128 = arith.constant 128 : index
    %c0_11 = arith.constant 0 : index
    %8 = vector.load %arg2[%c128, %c0_11] : memref<272x128xf32, #tpu.memory_space<vmem>>, vector<32x32xf32>
    %c160 = arith.constant 160 : index
    %c0_12 = arith.constant 0 : index
    %9 = vector.load %arg2[%c160, %c0_12] : memref<272x128xf32, #tpu.memory_space<vmem>>, vector<32x64xf32>
    %c192 = arith.constant 192 : index
    %c0_13 = arith.constant 0 : index
    %10 = vector.load %arg2[%c192, %c0_13] : memref<272x128xf32, #tpu.memory_space<vmem>>, vector<64x32xf32>
    %c256 = arith.constant 256 : index
    %c0_14 = arith.constant 0 : index
    %11 = vector.load %arg2[%c256, %c0_14] : memref<272x128xf32, #tpu.memory_space<vmem>>, vector<1x64xf32>
    %c264 = arith.constant 264 : index
    %c0_15 = arith.constant 0 : index
    %12 = vector.load %arg2[%c264, %c0_15] : memref<272x128xf32, #tpu.memory_space<vmem>>, vector<1x32xf32>
    %13 = tpu.iota {dimensions = array<i32: 1>} : vector<1x8x8xi32>
    %14 = tpu.iota {dimensions = array<i32: 2>} : vector<1x8x8xi32>
    %15 = arith.cmpi sgt, %14, %13 : vector<1x8x8xi32>
    %cst = arith.constant dense<0.000000e+00> : vector<2x8xf32>
    %16 = vector.multi_reduction <add>, %3, %cst [2] : vector<2x8x32xf32> to vector<2x8xf32>
    %17 = vector.shape_cast %16 : vector<2x8xf32> to vector<2x8x1xf32>
    %cst_16 = arith.constant 3.200000e+01 : f32
    %18 = vector.broadcast %cst_16 : f32 to vector<2x8x1xf32>
    %19 = arith.divf %17, %18 : vector<2x8x1xf32>
    %cst_17 = arith.constant dense<0.000000e+00> : vector<2x1xf32>
    %20 = vector.multi_reduction <add>, %19, %cst_17 [1] : vector<2x8x1xf32> to vector<2x1xf32>
    %21 = vector.shape_cast %20 : vector<2x1xf32> to vector<2x1x1xf32>
    %cst_18 = arith.constant 8.000000e+00 : f32
    %22 = vector.broadcast %cst_18 : f32 to vector<2x1x1xf32>
    %23 = arith.divf %21, %22 : vector<2x1x1xf32>
    %24 = vector.broadcast %23 : vector<2x1x1xf32> to vector<2x8x32xf32>
    %25 = arith.subf %3, %24 : vector<2x8x32xf32>
    %26 = arith.mulf %25, %25 : vector<2x8x32xf32>
    %cst_19 = arith.constant dense<0.000000e+00> : vector<2x8xf32>
    %27 = vector.multi_reduction <add>, %26, %cst_19 [2] : vector<2x8x32xf32> to vector<2x8xf32>
    %28 = vector.shape_cast %27 : vector<2x8xf32> to vector<2x8x1xf32>
    %cst_20 = arith.constant 3.200000e+01 : f32
    %29 = vector.broadcast %cst_20 : f32 to vector<2x8x1xf32>
    %30 = arith.divf %28, %29 : vector<2x8x1xf32>
    %cst_21 = arith.constant dense<0.000000e+00> : vector<2x1xf32>
    %31 = vector.multi_reduction <add>, %30, %cst_21 [1] : vector<2x8x1xf32> to vector<2x1xf32>
    %32 = vector.shape_cast %31 : vector<2x1xf32> to vector<2x1x1xf32>
    %cst_22 = arith.constant 8.000000e+00 : f32
    %33 = vector.broadcast %cst_22 : f32 to vector<2x1x1xf32>
    %34 = arith.divf %32, %33 : vector<2x1x1xf32>
    %cst_23 = arith.constant 9.99999974E-6 : f32
    %35 = vector.broadcast %cst_23 : f32 to vector<2x1x1xf32>
    %36 = arith.addf %34, %35 : vector<2x1x1xf32>
    %37 = math.rsqrt %36 : vector<2x1x1xf32>
    %38 = vector.broadcast %37 : vector<2x1x1xf32> to vector<2x8x32xf32>
    %39 = arith.mulf %25, %38 : vector<2x8x32xf32>
    %40 = vector.shape_cast %39 : vector<2x8x32xf32> to vector<16x32xf32>
    %cst_24 = arith.constant dense<0.000000e+00> : vector<16x96xf32>
    %41 = tpu.matmul %40, %4, %cst_24 {dimension_numbers = #tpu.dot_dimension_numbers<[1], [0], [0], [1], [0, 0, 1, 1], [], []>} : vector<16x32xf32>, vector<32x96xf32>, vector<16x96xf32> -> vector<16x96xf32>
    %42 = vector.extract_strided_slice %41 {offsets = [0, 0], sizes = [16, 8], strides = [1, 1]} : vector<16x96xf32> to vector<16x8xf32>
    %43 = vector.shape_cast %42 : vector<16x8xf32> to vector<2x8x8xf32>
    %44 = vector.extract_strided_slice %41 {offsets = [0, 8], sizes = [16, 8], strides = [1, 1]} : vector<16x96xf32> to vector<16x8xf32>
    %45 = vector.shape_cast %44 : vector<16x8xf32> to vector<2x8x8xf32>
    %46 = vector.extract_strided_slice %41 {offsets = [0, 16], sizes = [16, 8], strides = [1, 1]} : vector<16x96xf32> to vector<16x8xf32>
    %47 = vector.shape_cast %46 : vector<16x8xf32> to vector<2x8x8xf32>
    %48 = vector.extract_strided_slice %41 {offsets = [0, 24], sizes = [16, 8], strides = [1, 1]} : vector<16x96xf32> to vector<16x8xf32>
    %49 = vector.shape_cast %48 : vector<16x8xf32> to vector<2x8x8xf32>
    %50 = tpu.concatenate %43, %45, %47, %49 in 0 : vector<2x8x8xf32>, vector<2x8x8xf32>, vector<2x8x8xf32>, vector<2x8x8xf32> -> vector<8x8x8xf32>
    %51 = vector.extract_strided_slice %41 {offsets = [0, 32], sizes = [16, 8], strides = [1, 1]} : vector<16x96xf32> to vector<16x8xf32>
    %52 = vector.shape_cast %51 : vector<16x8xf32> to vector<2x8x8xf32>
    %53 = vector.extract_strided_slice %41 {offsets = [0, 40], sizes = [16, 8], strides = [1, 1]} : vector<16x96xf32> to vector<16x8xf32>
    %54 = vector.shape_cast %53 : vector<16x8xf32> to vector<2x8x8xf32>
    %55 = vector.extract_strided_slice %41 {offsets = [0, 48], sizes = [16, 8], strides = [1, 1]} : vector<16x96xf32> to vector<16x8xf32>
    %56 = vector.shape_cast %55 : vector<16x8xf32> to vector<2x8x8xf32>
    %57 = vector.extract_strided_slice %41 {offsets = [0, 56], sizes = [16, 8], strides = [1, 1]} : vector<16x96xf32> to vector<16x8xf32>
    %58 = vector.shape_cast %57 : vector<16x8xf32> to vector<2x8x8xf32>
    %59 = tpu.concatenate %52, %54, %56, %58 in 0 : vector<2x8x8xf32>, vector<2x8x8xf32>, vector<2x8x8xf32>, vector<2x8x8xf32> -> vector<8x8x8xf32>
    %60 = vector.extract_strided_slice %41 {offsets = [0, 64], sizes = [16, 8], strides = [1, 1]} : vector<16x96xf32> to vector<16x8xf32>
    %61 = vector.shape_cast %60 : vector<16x8xf32> to vector<2x8x8xf32>
    %62 = vector.extract_strided_slice %41 {offsets = [0, 72], sizes = [16, 8], strides = [1, 1]} : vector<16x96xf32> to vector<16x8xf32>
    %63 = vector.shape_cast %62 : vector<16x8xf32> to vector<2x8x8xf32>
    %64 = vector.extract_strided_slice %41 {offsets = [0, 80], sizes = [16, 8], strides = [1, 1]} : vector<16x96xf32> to vector<16x8xf32>
    %65 = vector.shape_cast %64 : vector<16x8xf32> to vector<2x8x8xf32>
    %66 = vector.extract_strided_slice %41 {offsets = [0, 88], sizes = [16, 8], strides = [1, 1]} : vector<16x96xf32> to vector<16x8xf32>
    %67 = vector.shape_cast %66 : vector<16x8xf32> to vector<2x8x8xf32>
    %68 = tpu.concatenate %61, %63, %65, %67 in 0 : vector<2x8x8xf32>, vector<2x8x8xf32>, vector<2x8x8xf32>, vector<2x8x8xf32> -> vector<8x8x8xf32>
    "tpu.trace_start"() <{level = 10 : i32, message = "zqd,zkd->zqk"}> : () -> ()
    %cst_25 = arith.constant dense<0.000000e+00> : vector<8x8x8xf32>
    %69 = tpu.matmul %50, %59, %cst_25 {dimension_numbers = #tpu.dot_dimension_numbers<[2], [2], [1], [1], [0, 0, 0, 1, 1, 1], [0], [0]>} : vector<8x8x8xf32>, vector<8x8x8xf32>, vector<8x8x8xf32> -> vector<8x8x8xf32>
    "tpu.trace_stop"() : () -> ()
    %cst_26 = arith.constant 0.353553385 : f32
    %70 = vector.broadcast %cst_26 : f32 to vector<8x8x8xf32>
    %71 = arith.mulf %69, %70 : vector<8x8x8xf32>
    %cst_27 = arith.constant 0xFF800000 : f32
    %72 = vector.shape_cast %15 : vector<1x8x8xi1> to vector<1x8x8xi1>
    %73 = vector.broadcast %72 : vector<1x8x8xi1> to vector<8x8x8xi1>
    %74 = vector.broadcast %cst_27 : f32 to vector<8x8x8xf32>
    %75 = arith.select %73, %74, %71 : vector<8x8x8xi1>, vector<8x8x8xf32>
    %cst_28 = arith.constant dense<0xFF800000> : vector<8x8xf32>
    %76 = vector.multi_reduction <maximumf>, %75, %cst_28 [2] : vector<8x8x8xf32> to vector<8x8xf32>
    %77 = vector.shape_cast %76 : vector<8x8xf32> to vector<8x8x1xf32>
    %78 = vector.broadcast %77 : vector<8x8x1xf32> to vector<8x8x8xf32>
    %79 = arith.subf %75, %78 : vector<8x8x8xf32>
    %80 = math.exp %79 : vector<8x8x8xf32>
    %cst_29 = arith.constant dense<0.000000e+00> : vector<8x8xf32>
    %81 = vector.multi_reduction <add>, %80, %cst_29 [2] : vector<8x8x8xf32> to vector<8x8xf32>
    %82 = vector.shape_cast %81 : vector<8x8xf32> to vector<8x8x1xf32>
    %83 = tpu.reciprocal %82 {approx = true} : vector<8x8x1xf32> -> vector<8x8x1xf32>
    %84 = arith.mulf %82, %83 : vector<8x8x1xf32>
    %cst_30 = arith.constant 2.000000e+00 : f32
    %85 = vector.broadcast %cst_30 : f32 to vector<8x8x1xf32>
    %86 = arith.subf %85, %84 : vector<8x8x1xf32>
    %87 = arith.mulf %83, %86 : vector<8x8x1xf32>
    %88 = vector.broadcast %87 : vector<8x8x1xf32> to vector<8x8x8xf32>
    %89 = arith.mulf %80, %88 : vector<8x8x8xf32>
    "tpu.trace_start"() <{level = 10 : i32, message = "zqk,zkd->zqd"}> : () -> ()
    %cst_31 = arith.constant dense<0.000000e+00> : vector<8x8x8xf32>
    %90 = tpu.matmul %89, %68, %cst_31 {dimension_numbers = #tpu.dot_dimension_numbers<[2], [1], [1], [2], [0, 0, 0, 1, 1, 2], [0], [0]>} : vector<8x8x8xf32>, vector<8x8x8xf32>, vector<8x8x8xf32> -> vector<8x8x8xf32>
    "tpu.trace_stop"() : () -> ()
    %91 = vector.extract_strided_slice %90 {offsets = [0, 0, 0], sizes = [2, 8, 8], strides = [1, 1, 1]} : vector<8x8x8xf32> to vector<2x8x8xf32>
    %92 = vector.shape_cast %91 : vector<2x8x8xf32> to vector<16x8xf32>
    %93 = vector.extract_strided_slice %90 {offsets = [2, 0, 0], sizes = [2, 8, 8], strides = [1, 1, 1]} : vector<8x8x8xf32> to vector<2x8x8xf32>
    %94 = vector.shape_cast %93 : vector<2x8x8xf32> to vector<16x8xf32>
    %95 = vector.extract_strided_slice %90 {offsets = [4, 0, 0], sizes = [2, 8, 8], strides = [1, 1, 1]} : vector<8x8x8xf32> to vector<2x8x8xf32>
    %96 = vector.shape_cast %95 : vector<2x8x8xf32> to vector<16x8xf32>
    %97 = vector.extract_strided_slice %90 {offsets = [6, 0, 0], sizes = [2, 8, 8], strides = [1, 1, 1]} : vector<8x8x8xf32> to vector<2x8x8xf32>
    %98 = vector.shape_cast %97 : vector<2x8x8xf32> to vector<16x8xf32>
    %99 = tpu.concatenate %92, %94, %96, %98 in 1 : vector<16x8xf32>, vector<16x8xf32>, vector<16x8xf32>, vector<16x8xf32> -> vector<16x32xf32>
    %cst_32 = arith.constant dense<0.000000e+00> : vector<16x32xf32>
    %100 = tpu.matmul %99, %5, %cst_32 {dimension_numbers = #tpu.dot_dimension_numbers<[1], [0], [0], [1], [0, 0, 1, 1], [], []>} : vector<16x32xf32>, vector<32x32xf32>, vector<16x32xf32> -> vector<16x32xf32>
    %101 = vector.shape_cast %100 : vector<16x32xf32> to vector<2x8x32xf32>
    %102 = arith.addf %3, %101 : vector<2x8x32xf32>
    %cst_33 = arith.constant dense<0.000000e+00> : vector<2x8xf32>
    %103 = vector.multi_reduction <add>, %102, %cst_33 [2] : vector<2x8x32xf32> to vector<2x8xf32>
    %104 = vector.shape_cast %103 : vector<2x8xf32> to vector<2x8x1xf32>
    %cst_34 = arith.constant 3.200000e+01 : f32
    %105 = vector.broadcast %cst_34 : f32 to vector<2x8x1xf32>
    %106 = arith.divf %104, %105 : vector<2x8x1xf32>
    %cst_35 = arith.constant dense<0.000000e+00> : vector<2x1xf32>
    %107 = vector.multi_reduction <add>, %106, %cst_35 [1] : vector<2x8x1xf32> to vector<2x1xf32>
    %108 = vector.shape_cast %107 : vector<2x1xf32> to vector<2x1x1xf32>
    %cst_36 = arith.constant 8.000000e+00 : f32
    %109 = vector.broadcast %cst_36 : f32 to vector<2x1x1xf32>
    %110 = arith.divf %108, %109 : vector<2x1x1xf32>
    %111 = vector.broadcast %110 : vector<2x1x1xf32> to vector<2x8x32xf32>
    %112 = arith.subf %102, %111 : vector<2x8x32xf32>
    %113 = arith.mulf %112, %112 : vector<2x8x32xf32>
    %cst_37 = arith.constant dense<0.000000e+00> : vector<2x8xf32>
    %114 = vector.multi_reduction <add>, %113, %cst_37 [2] : vector<2x8x32xf32> to vector<2x8xf32>
    %115 = vector.shape_cast %114 : vector<2x8xf32> to vector<2x8x1xf32>
    %cst_38 = arith.constant 3.200000e+01 : f32
    %116 = vector.broadcast %cst_38 : f32 to vector<2x8x1xf32>
    %117 = arith.divf %115, %116 : vector<2x8x1xf32>
    %cst_39 = arith.constant dense<0.000000e+00> : vector<2x1xf32>
    %118 = vector.multi_reduction <add>, %117, %cst_39 [1] : vector<2x8x1xf32> to vector<2x1xf32>
    %119 = vector.shape_cast %118 : vector<2x1xf32> to vector<2x1x1xf32>
    %cst_40 = arith.constant 8.000000e+00 : f32
    %120 = vector.broadcast %cst_40 : f32 to vector<2x1x1xf32>
    %121 = arith.divf %119, %120 : vector<2x1x1xf32>
    %cst_41 = arith.constant 9.99999974E-6 : f32
    %122 = vector.broadcast %cst_41 : f32 to vector<2x1x1xf32>
    %123 = arith.addf %121, %122 : vector<2x1x1xf32>
    %124 = math.rsqrt %123 : vector<2x1x1xf32>
    %125 = vector.broadcast %124 : vector<2x1x1xf32> to vector<2x8x32xf32>
    %126 = arith.mulf %112, %125 : vector<2x8x32xf32>
    %cst_42 = arith.constant dense<0.000000e+00> : vector<2x8xf32>
    %127 = vector.multi_reduction <add>, %1, %cst_42 [2] : vector<2x8x32xf32> to vector<2x8xf32>
    %128 = vector.shape_cast %127 : vector<2x8xf32> to vector<2x8x1xf32>
    %cst_43 = arith.constant 3.200000e+01 : f32
    %129 = vector.broadcast %cst_43 : f32 to vector<2x8x1xf32>
    %130 = arith.divf %128, %129 : vector<2x8x1xf32>
    %cst_44 = arith.constant dense<0.000000e+00> : vector<2x1xf32>
    %131 = vector.multi_reduction <add>, %130, %cst_44 [1] : vector<2x8x1xf32> to vector<2x1xf32>
    %132 = vector.shape_cast %131 : vector<2x1xf32> to vector<2x1x1xf32>
    %cst_45 = arith.constant 8.000000e+00 : f32
    %133 = vector.broadcast %cst_45 : f32 to vector<2x1x1xf32>
    %134 = arith.divf %132, %133 : vector<2x1x1xf32>
    %135 = vector.broadcast %134 : vector<2x1x1xf32> to vector<2x8x32xf32>
    %136 = arith.subf %1, %135 : vector<2x8x32xf32>
    %137 = arith.mulf %136, %136 : vector<2x8x32xf32>
    %cst_46 = arith.constant dense<0.000000e+00> : vector<2x8xf32>
    %138 = vector.multi_reduction <add>, %137, %cst_46 [2] : vector<2x8x32xf32> to vector<2x8xf32>
    %139 = vector.shape_cast %138 : vector<2x8xf32> to vector<2x8x1xf32>
    %cst_47 = arith.constant 3.200000e+01 : f32
    %140 = vector.broadcast %cst_47 : f32 to vector<2x8x1xf32>
    %141 = arith.divf %139, %140 : vector<2x8x1xf32>
    %cst_48 = arith.constant dense<0.000000e+00> : vector<2x1xf32>
    %142 = vector.multi_reduction <add>, %141, %cst_48 [1] : vector<2x8x1xf32> to vector<2x1xf32>
    %143 = vector.shape_cast %142 : vector<2x1xf32> to vector<2x1x1xf32>
    %cst_49 = arith.constant 8.000000e+00 : f32
    %144 = vector.broadcast %cst_49 : f32 to vector<2x1x1xf32>
    %145 = arith.divf %143, %144 : vector<2x1x1xf32>
    %cst_50 = arith.constant 9.99999974E-6 : f32
    %146 = vector.broadcast %cst_50 : f32 to vector<2x1x1xf32>
    %147 = arith.addf %145, %146 : vector<2x1x1xf32>
    %148 = math.rsqrt %147 : vector<2x1x1xf32>
    %149 = vector.broadcast %148 : vector<2x1x1xf32> to vector<2x8x32xf32>
    %150 = arith.mulf %136, %149 : vector<2x8x32xf32>
    %151 = vector.shape_cast %126 : vector<2x8x32xf32> to vector<16x32xf32>
    %cst_51 = arith.constant dense<0.000000e+00> : vector<16x32xf32>
    %152 = tpu.matmul %151, %6, %cst_51 {dimension_numbers = #tpu.dot_dimension_numbers<[1], [0], [0], [1], [0, 0, 1, 1], [], []>} : vector<16x32xf32>, vector<32x32xf32>, vector<16x32xf32> -> vector<16x32xf32>
    %153 = vector.shape_cast %150 : vector<2x8x32xf32> to vector<16x32xf32>
    %cst_52 = arith.constant dense<0.000000e+00> : vector<16x64xf32>
    %154 = tpu.matmul %153, %7, %cst_52 {dimension_numbers = #tpu.dot_dimension_numbers<[1], [0], [0], [1], [0, 0, 1, 1], [], []>} : vector<16x32xf32>, vector<32x64xf32>, vector<16x64xf32> -> vector<16x64xf32>
    %155 = vector.extract_strided_slice %152 {offsets = [0, 0], sizes = [16, 8], strides = [1, 1]} : vector<16x32xf32> to vector<16x8xf32>
    %156 = vector.shape_cast %155 : vector<16x8xf32> to vector<2x8x8xf32>
    %157 = vector.extract_strided_slice %152 {offsets = [0, 8], sizes = [16, 8], strides = [1, 1]} : vector<16x32xf32> to vector<16x8xf32>
    %158 = vector.shape_cast %157 : vector<16x8xf32> to vector<2x8x8xf32>
    %159 = vector.extract_strided_slice %152 {offsets = [0, 16], sizes = [16, 8], strides = [1, 1]} : vector<16x32xf32> to vector<16x8xf32>
    %160 = vector.shape_cast %159 : vector<16x8xf32> to vector<2x8x8xf32>
    %161 = vector.extract_strided_slice %152 {offsets = [0, 24], sizes = [16, 8], strides = [1, 1]} : vector<16x32xf32> to vector<16x8xf32>
    %162 = vector.shape_cast %161 : vector<16x8xf32> to vector<2x8x8xf32>
    %163 = tpu.concatenate %156, %158, %160, %162 in 0 : vector<2x8x8xf32>, vector<2x8x8xf32>, vector<2x8x8xf32>, vector<2x8x8xf32> -> vector<8x8x8xf32>
    %164 = vector.extract_strided_slice %154 {offsets = [0, 0], sizes = [16, 8], strides = [1, 1]} : vector<16x64xf32> to vector<16x8xf32>
    %165 = vector.shape_cast %164 : vector<16x8xf32> to vector<2x8x8xf32>
    %166 = vector.extract_strided_slice %154 {offsets = [0, 8], sizes = [16, 8], strides = [1, 1]} : vector<16x64xf32> to vector<16x8xf32>
    %167 = vector.shape_cast %166 : vector<16x8xf32> to vector<2x8x8xf32>
    %168 = vector.extract_strided_slice %154 {offsets = [0, 16], sizes = [16, 8], strides = [1, 1]} : vector<16x64xf32> to vector<16x8xf32>
    %169 = vector.shape_cast %168 : vector<16x8xf32> to vector<2x8x8xf32>
    %170 = vector.extract_strided_slice %154 {offsets = [0, 24], sizes = [16, 8], strides = [1, 1]} : vector<16x64xf32> to vector<16x8xf32>
    %171 = vector.shape_cast %170 : vector<16x8xf32> to vector<2x8x8xf32>
    %172 = tpu.concatenate %165, %167, %169, %171 in 0 : vector<2x8x8xf32>, vector<2x8x8xf32>, vector<2x8x8xf32>, vector<2x8x8xf32> -> vector<8x8x8xf32>
    %173 = vector.extract_strided_slice %154 {offsets = [0, 32], sizes = [16, 8], strides = [1, 1]} : vector<16x64xf32> to vector<16x8xf32>
    %174 = vector.shape_cast %173 : vector<16x8xf32> to vector<2x8x8xf32>
    %175 = vector.extract_strided_slice %154 {offsets = [0, 40], sizes = [16, 8], strides = [1, 1]} : vector<16x64xf32> to vector<16x8xf32>
    %176 = vector.shape_cast %175 : vector<16x8xf32> to vector<2x8x8xf32>
    %177 = vector.extract_strided_slice %154 {offsets = [0, 48], sizes = [16, 8], strides = [1, 1]} : vector<16x64xf32> to vector<16x8xf32>
    %178 = vector.shape_cast %177 : vector<16x8xf32> to vector<2x8x8xf32>
    %179 = vector.extract_strided_slice %154 {offsets = [0, 56], sizes = [16, 8], strides = [1, 1]} : vector<16x64xf32> to vector<16x8xf32>
    %180 = vector.shape_cast %179 : vector<16x8xf32> to vector<2x8x8xf32>
    %181 = tpu.concatenate %174, %176, %178, %180 in 0 : vector<2x8x8xf32>, vector<2x8x8xf32>, vector<2x8x8xf32>, vector<2x8x8xf32> -> vector<8x8x8xf32>
    "tpu.trace_start"() <{level = 10 : i32, message = "zqd,zkd->zqk"}> : () -> ()
    %cst_53 = arith.constant dense<0.000000e+00> : vector<8x8x8xf32>
    %182 = tpu.matmul %163, %172, %cst_53 {dimension_numbers = #tpu.dot_dimension_numbers<[2], [2], [1], [1], [0, 0, 0, 1, 1, 1], [0], [0]>} : vector<8x8x8xf32>, vector<8x8x8xf32>, vector<8x8x8xf32> -> vector<8x8x8xf32>
    "tpu.trace_stop"() : () -> ()
    %cst_54 = arith.constant 0.353553385 : f32
    %183 = vector.broadcast %cst_54 : f32 to vector<8x8x8xf32>
    %184 = arith.mulf %182, %183 : vector<8x8x8xf32>
    %cst_55 = arith.constant dense<0xFF800000> : vector<8x8xf32>
    %185 = vector.multi_reduction <maximumf>, %184, %cst_55 [2] : vector<8x8x8xf32> to vector<8x8xf32>
    %186 = vector.shape_cast %185 : vector<8x8xf32> to vector<8x8x1xf32>
    %187 = vector.broadcast %186 : vector<8x8x1xf32> to vector<8x8x8xf32>
    %188 = arith.subf %184, %187 : vector<8x8x8xf32>
    %189 = math.exp %188 : vector<8x8x8xf32>
    %cst_56 = arith.constant dense<0.000000e+00> : vector<8x8xf32>
    %190 = vector.multi_reduction <add>, %189, %cst_56 [2] : vector<8x8x8xf32> to vector<8x8xf32>
    %191 = vector.shape_cast %190 : vector<8x8xf32> to vector<8x8x1xf32>
    %192 = tpu.reciprocal %191 {approx = true} : vector<8x8x1xf32> -> vector<8x8x1xf32>
    %193 = arith.mulf %191, %192 : vector<8x8x1xf32>
    %cst_57 = arith.constant 2.000000e+00 : f32
    %194 = vector.broadcast %cst_57 : f32 to vector<8x8x1xf32>
    %195 = arith.subf %194, %193 : vector<8x8x1xf32>
    %196 = arith.mulf %192, %195 : vector<8x8x1xf32>
    %197 = vector.broadcast %196 : vector<8x8x1xf32> to vector<8x8x8xf32>
    %198 = arith.mulf %189, %197 : vector<8x8x8xf32>
    "tpu.trace_start"() <{level = 10 : i32, message = "zqk,zkd->zqd"}> : () -> ()
    %cst_58 = arith.constant dense<0.000000e+00> : vector<8x8x8xf32>
    %199 = tpu.matmul %198, %181, %cst_58 {dimension_numbers = #tpu.dot_dimension_numbers<[2], [1], [1], [2], [0, 0, 0, 1, 1, 2], [0], [0]>} : vector<8x8x8xf32>, vector<8x8x8xf32>, vector<8x8x8xf32> -> vector<8x8x8xf32>
    "tpu.trace_stop"() : () -> ()
    %200 = vector.extract_strided_slice %199 {offsets = [0, 0, 0], sizes = [2, 8, 8], strides = [1, 1, 1]} : vector<8x8x8xf32> to vector<2x8x8xf32>
    %201 = vector.shape_cast %200 : vector<2x8x8xf32> to vector<16x8xf32>
    %202 = vector.extract_strided_slice %199 {offsets = [2, 0, 0], sizes = [2, 8, 8], strides = [1, 1, 1]} : vector<8x8x8xf32> to vector<2x8x8xf32>
    %203 = vector.shape_cast %202 : vector<2x8x8xf32> to vector<16x8xf32>
    %204 = vector.extract_strided_slice %199 {offsets = [4, 0, 0], sizes = [2, 8, 8], strides = [1, 1, 1]} : vector<8x8x8xf32> to vector<2x8x8xf32>
    %205 = vector.shape_cast %204 : vector<2x8x8xf32> to vector<16x8xf32>
    %206 = vector.extract_strided_slice %199 {offsets = [6, 0, 0], sizes = [2, 8, 8], strides = [1, 1, 1]} : vector<8x8x8xf32> to vector<2x8x8xf32>
    %207 = vector.shape_cast %206 : vector<2x8x8xf32> to vector<16x8xf32>
    %208 = tpu.concatenate %201, %203, %205, %207 in 1 : vector<16x8xf32>, vector<16x8xf32>, vector<16x8xf32>, vector<16x8xf32> -> vector<16x32xf32>
    %cst_59 = arith.constant dense<0.000000e+00> : vector<16x32xf32>
    %209 = tpu.matmul %208, %8, %cst_59 {dimension_numbers = #tpu.dot_dimension_numbers<[1], [0], [0], [1], [0, 0, 1, 1], [], []>} : vector<16x32xf32>, vector<32x32xf32>, vector<16x32xf32> -> vector<16x32xf32>
    %210 = vector.shape_cast %209 : vector<16x32xf32> to vector<2x8x32xf32>
    %211 = arith.addf %102, %210 : vector<2x8x32xf32>
    %cst_60 = arith.constant dense<0.000000e+00> : vector<2x8xf32>
    %212 = vector.multi_reduction <add>, %211, %cst_60 [2] : vector<2x8x32xf32> to vector<2x8xf32>
    %213 = vector.shape_cast %212 : vector<2x8xf32> to vector<2x8x1xf32>
    %cst_61 = arith.constant 3.200000e+01 : f32
    %214 = vector.broadcast %cst_61 : f32 to vector<2x8x1xf32>
    %215 = arith.divf %213, %214 : vector<2x8x1xf32>
    %cst_62 = arith.constant dense<0.000000e+00> : vector<2x1xf32>
    %216 = vector.multi_reduction <add>, %215, %cst_62 [1] : vector<2x8x1xf32> to vector<2x1xf32>
    %217 = vector.shape_cast %216 : vector<2x1xf32> to vector<2x1x1xf32>
    %cst_63 = arith.constant 8.000000e+00 : f32
    %218 = vector.broadcast %cst_63 : f32 to vector<2x1x1xf32>
    %219 = arith.divf %217, %218 : vector<2x1x1xf32>
    %220 = vector.broadcast %219 : vector<2x1x1xf32> to vector<2x8x32xf32>
    %221 = arith.subf %211, %220 : vector<2x8x32xf32>
    %222 = arith.mulf %221, %221 : vector<2x8x32xf32>
    %cst_64 = arith.constant dense<0.000000e+00> : vector<2x8xf32>
    %223 = vector.multi_reduction <add>, %222, %cst_64 [2] : vector<2x8x32xf32> to vector<2x8xf32>
    %224 = vector.shape_cast %223 : vector<2x8xf32> to vector<2x8x1xf32>
    %cst_65 = arith.constant 3.200000e+01 : f32
    %225 = vector.broadcast %cst_65 : f32 to vector<2x8x1xf32>
    %226 = arith.divf %224, %225 : vector<2x8x1xf32>
    %cst_66 = arith.constant dense<0.000000e+00> : vector<2x1xf32>
    %227 = vector.multi_reduction <add>, %226, %cst_66 [1] : vector<2x8x1xf32> to vector<2x1xf32>
    %228 = vector.shape_cast %227 : vector<2x1xf32> to vector<2x1x1xf32>
    %cst_67 = arith.constant 8.000000e+00 : f32
    %229 = vector.broadcast %cst_67 : f32 to vector<2x1x1xf32>
    %230 = arith.divf %228, %229 : vector<2x1x1xf32>
    %cst_68 = arith.constant 9.99999974E-6 : f32
    %231 = vector.broadcast %cst_68 : f32 to vector<2x1x1xf32>
    %232 = arith.addf %230, %231 : vector<2x1x1xf32>
    %233 = math.rsqrt %232 : vector<2x1x1xf32>
    %234 = vector.broadcast %233 : vector<2x1x1xf32> to vector<2x8x32xf32>
    %235 = arith.mulf %221, %234 : vector<2x8x32xf32>
    %236 = vector.shape_cast %235 : vector<2x8x32xf32> to vector<16x32xf32>
    %cst_69 = arith.constant dense<0.000000e+00> : vector<16x64xf32>
    %237 = tpu.matmul %236, %9, %cst_69 {dimension_numbers = #tpu.dot_dimension_numbers<[1], [0], [0], [1], [0, 0, 1, 1], [], []>} : vector<16x32xf32>, vector<32x64xf32>, vector<16x64xf32> -> vector<16x64xf32>
    %238 = vector.broadcast %11 : vector<1x64xf32> to vector<16x64xf32>
    %239 = arith.addf %237, %238 : vector<16x64xf32>
    %cst_70 = arith.constant 0.000000e+00 : f32
    %240 = vector.broadcast %cst_70 : f32 to vector<16x64xf32>
    %241 = arith.maximumf %239, %240 : vector<16x64xf32>
    %cst_71 = arith.constant dense<0.000000e+00> : vector<16x32xf32>
    %242 = tpu.matmul %241, %10, %cst_71 {dimension_numbers = #tpu.dot_dimension_numbers<[1], [0], [0], [1], [0, 0, 1, 1], [], []>} : vector<16x64xf32>, vector<64x32xf32>, vector<16x32xf32> -> vector<16x32xf32>
    %243 = vector.broadcast %12 : vector<1x32xf32> to vector<16x32xf32>
    %244 = arith.addf %242, %243 : vector<16x32xf32>
    %245 = vector.shape_cast %244 : vector<16x32xf32> to vector<2x8x32xf32>
    %246 = arith.addf %211, %245 : vector<2x8x32xf32>
    %c0_72 = arith.constant 0 : index
    %c0_73 = arith.constant 0 : index
    %c0_74 = arith.constant 0 : index
    %247 = vector.load %arg3[%c0_72, %c0_73, %c0_74] : memref<2x8x32xf32, #tpu.memory_space<vmem>>, vector<2x8x32xf32>
    tpu.vector_store %arg3[%c0_72, %c0_73, %c0_74], %246 {strides = array<i32>} : memref<2x8x32xf32, #tpu.memory_space<vmem>>, vector<2x8x32xf32>,
    return
  }
  func.func @transform_0(%arg0: i32) -> (i32, i32, i32, i32) {
    %c0_i32 = arith.constant 0 : i32
    %c0_i32_0 = arith.constant 0 : i32
    %c0_i32_1 = arith.constant 0 : i32
    %c0_i32_2 = arith.constant 0 : i32
    %c0_i32_3 = arith.constant 0 : i32
    return %c0_i32, %c0_i32_0, %c0_i32_1, %c0_i32_2 : i32, i32, i32, i32
  }
  func.func @transform_1(%arg0: i32) -> (i32, i32) {
    %c0_i32 = arith.constant 0 : i32
    %c0_i32_0 = arith.constant 0 : i32
    %c0_i32_1 = arith.constant 0 : i32
    return %c0_i32, %c0_i32_0 : i32, i32
  }
  func.func @transform_2(%arg0: i32) -> (i32, i32, i32) {
    %c0_i32 = arith.constant 0 : i32
    %c0_i32_0 = arith.constant 0 : i32
    %c0_i32_1 = arith.constant 0 : i32
    %c0_i32_2 = arith.constant 0 : i32
    return %c0_i32, %c0_i32_0, %c0_i32_1 : i32, i32, i32
  }
}

</mosaic_0001>

<llo_original>
// kernel: tpu_custom_call.1
$region0: #{tpu_custom_call.1}
  #allocation0 [shape = 'u32[]', space=smem, size = 0x4, offset = 0x4, fixed_abs, tag = 'smem constant byte address 0x4 - core index']
  #allocation1 [shape = 'u32[72,128]{1,0:T(1,128)}', space=vmem, size = 0x9000, scoped, tag = 'internal scratch']
  %s0 = inlined_call_operand.hbm [shape: f32[2,2,8,32], index: 0, kind: input, shape index: {}]
  %s1 = inlined_call_operand.hbm [shape: f32[272,128], index: 1, kind: input, shape index: {}]
  %s2 = inlined_call_operand.hbm [shape: f32[2,8,32], index: 2, kind: output, shape index: {}]
  %s3 = sld [smem:[#allocation0]]
  $region26: #{tpu_custom_call.1} parent=0
    _
  %s5 = ssub.s32 1, %s3
  %s6 = scalar_select 0, %s5, %s3
  $region1: #{tpu_custom_call.1} parent=0
    #allocation2 [shape = 'u8[16384]{0}', space=vmem, size = 0x4000, scoped, tag = 'input window, operand 0, single buffered']
    #allocation3 [shape = 's32[1]{0}', space=sflag, size = 0x4, scoped, tag = 'scoped memory for tpu_custom_call.1']
    #allocation4 [shape = 's32[1]{0}', space=sflag, size = 0x4, scoped, tag = 'scoped memory for tpu_custom_call.1']
    #allocation5 [shape = 'u8[139264]{0}', space=vmem, size = 0x22000, scoped, tag = 'input window, operand 1, single buffered']
    #allocation6 [shape = 's32[1]{0}', space=sflag, size = 0x4, scoped, tag = 'scoped memory for tpu_custom_call.1']
    #allocation7 [shape = 'u8[8192]{0}', space=vmem, size = 0x2000, scoped, tag = 'output window, operand 0, single buffered']
    %7 = vsyncpa [#allocation3], 0
    %8 = vsyncpa [#allocation6], 0
    %9 = vsyncpa [#allocation4], 0
    // Predicated region
    $region2: #{tpu_custom_call.1} parent=1 // pred_check
      _
    $region3: #{tpu_custom_call.1} parent=1 // pred_check_branch
      %11 = sbr.rel (0) target = $region5
    $region4: #{tpu_custom_call.1} parent=1 // pred_region
      %13 = vsyncadd [#allocation3], 0
      %s14 = sshll.u32 %s0, 4
      %s15 = int_to_ptr.hbm [resolvable:$true] %s14
      %s16 = sshll.u32 [#allocation2], 4
      %s17 = int_to_ptr.vmem [resolvable:$true] %s16
      %22 = dma.hbm_to_vmem [thread:$0]  %s15, 512, %s17, [#allocation3], 128, 128, 8
    $region5: #{tpu_custom_call.1} parent=1 // pred_fallthru
      _
    // Predicated region
    $region6: #{tpu_custom_call.1} parent=1 // pred_check
      _
    $region7: #{tpu_custom_call.1} parent=1 // pred_check_branch
      %24 = sbr.rel (0) target = $region9
    $region8: #{tpu_custom_call.1} parent=1 // pred_region
      %26 = vsyncadd [#allocation6], 0
      %s27 = sshll.u32 %s1, 4
      %s28 = int_to_ptr.hbm [resolvable:$true] %s27
      %s29 = sshll.u32 [#allocation5], 4
      %s30 = int_to_ptr.vmem [resolvable:$true] %s29
      %35 = dma.hbm_to_vmem [thread:$0]  %s28, 4352, %s30, [#allocation6], 128, 128, 8
    $region9: #{tpu_custom_call.1} parent=1 // pred_fallthru
      _
    // Predicated region
    $region10: #{tpu_custom_call.1} parent=1 // pred_check
      _
    $region11: #{tpu_custom_call.1} parent=1 // pred_check_branch
      %37 = sbr.rel (0) target = $region13
    $region12: #{tpu_custom_call.1} parent=1 // pred_region
      %39 = dma.done [#allocation3], 512
    $region13: #{tpu_custom_call.1} parent=1 // pred_fallthru
      _
    // Predicated region
    $region14: #{tpu_custom_call.1} parent=1 // pred_check
      _
    $region15: #{tpu_custom_call.1} parent=1 // pred_check_branch
      %41 = sbr.rel (0) target = $region17
    $region16: #{tpu_custom_call.1} parent=1 // pred_region
      %43 = dma.done [#allocation6], 4352
    $region17: #{tpu_custom_call.1} parent=1 // pred_fallthru
      _
    %v44 = vld [vmem:[#allocation2] sm:$0xff]
    %v45 = vld [vmem:[#allocation2 + $0x8] sm:$0xff]
    %s46 = scalar_lea.vmem [#allocation2], 16
    %v47 = vld [vmem:[%s46] sm:$0xff]
    %v48 = vld [vmem:[%s46 + $0x8] sm:$0xff]
    %v49 = vld [vmem:[#allocation5] sm:$0xff]
    %v50 = vld [vmem:[#allocation5 + $0x8] sm:$0xff]
    %v51 = vld [vmem:[#allocation5 + $0x10] sm:$0xff]
    %v52 = vld [vmem:[#allocation5 + $0x18] sm:$0xff]
    %v53 = vld [vmem:[#allocation5 + $0x20] sm:$0xff]
    %v54 = vld [vmem:[#allocation5 + $0x28] sm:$0xff]
    %v55 = vld [vmem:[#allocation5 + $0x30] sm:$0xff]
    %v56 = vld [vmem:[#allocation5 + $0x38] sm:$0xff]
    %v57 = vld [vmem:[#allocation5 + $0x40] sm:$0xff]
    %v58 = vld [vmem:[#allocation5 + $0x48] sm:$0xff]
    %v59 = vld [vmem:[#allocation5 + $0x50] sm:$0xff]
    %v60 = vld [vmem:[#allocation5 + $0x58] sm:$0xff]
    %v61 = vld [vmem:[#allocation5 + $0x60] sm:$0xff]
    %v62 = vld [vmem:[#allocation5 + $0x68] sm:$0xff]
    %v63 = vld [vmem:[#allocation5 + $0x70] sm:$0xff]
    %v64 = vld [vmem:[#allocation5 + $0x78] sm:$0xff]
    %v65 = vld [vmem:[#allocation5 + $0x80] sm:$0xff]
    %v66 = vld [vmem:[#allocation5 + $0x88] sm:$0xff]
    %v67 = vld [vmem:[#allocation5 + $0x90] sm:$0xff]
    %v68 = vld [vmem:[#allocation5 + $0x98] sm:$0xff]
    %v69 = vld [vmem:[#allocation5 + $0xa0] sm:$0xff]
    %v70 = vld [vmem:[#allocation5 + $0xa8] sm:$0xff]
    %v71 = vld [vmem:[#allocation5 + $0xb0] sm:$0xff]
    %v72 = vld [vmem:[#allocation5 + $0xb8] sm:$0xff]
    %v73 = vld [vmem:[#allocation5 + $0xc0] sm:$0xff]
    %v74 = vld [vmem:[#allocation5 + $0xc8] sm:$0xff]
    %v75 = vld [vmem:[#allocation5 + $0xd0] sm:$0xff]
    %v76 = vld [vmem:[#allocation5 + $0xd8] sm:$0xff]
    %v77 = vld [vmem:[#allocation5 + $0xe0] sm:$0xff]
    %v78 = vld [vmem:[#allocation5 + $0xe8] sm:$0xff]
    %v79 = vld [vmem:[#allocation5 + $0xf0] sm:$0xff]
    %v80 = vld [vmem:[#allocation5 + $0xf8] sm:$0xff]
    %v81 = vld [vmem:[#allocation5 + $0x100] sm:$0x1]
    %v82 = vld [vmem:[#allocation5 + $0x108] sm:$0x1]
    %v83 = vlaneseq
    %v84 = vshrl.u32 %v83, 7
    %v85 = vlaneseq
    %v86 = vand.u32 %v85, 127
    %vm87 = vcmp.gt.s32.totalorder %v86, %v84
    %vm88 = vcmask 261120
    %v89 = vsel %vm88, %v47, 0.0
    %90 = vadd.xlane.f32.xlu0 %v89
    %v91 = vpop.xlane.xlu0 %90
    %v92 = vsel %vm88, %v48, 0.0
    %93 = vadd.xlane.f32.xlu0 %v92
    %v94 = vpop.xlane.xlu0 %93
    %v95 = vrcp.pop 32.0
    %v96 = vmul.f32 32.0, %v95
    %v97 = vsub.f32 1.0, %v96
    %v98 = vmul.f32 %v95, %v97
    %v99 = vadd.f32 %v95, %v98
    %vm100 = vweird.f32 %v95
    %v101 = vsel %vm100, %v95, %v99
    %v102 = vmul.f32 %v91, %v101
    %v103 = vmul.f32 %v94, %v101
    %v104 = vrot.slane %v102, 4
    %v105 = vadd.f32 %v102, %v104
    %v106 = vrot.slane %v105, 2
    %v107 = vadd.f32 %v105, %v106
    %v108 = vrot.slane %v107, 1
    %v109 = vadd.f32 %v107, %v108
    %v110 = vrot.slane %v103, 4
    %v111 = vadd.f32 %v103, %v110
    %v112 = vrot.slane %v111, 2
    %v113 = vadd.f32 %v111, %v112
    %v114 = vrot.slane %v113, 1
    %v115 = vadd.f32 %v113, %v114
    %v116 = vrcp.pop 8.0
    %v117 = vmul.f32 8.0, %v116
    %v118 = vsub.f32 1.0, %v117
    %v119 = vmul.f32 %v116, %v118
    %v120 = vadd.f32 %v116, %v119
    %vm121 = vweird.f32 %v116
    %v122 = vsel %vm121, %v116, %v120
    %v123 = vmul.f32 %v109, %v122
    %v124 = vmul.f32 %v115, %v122
    %v125 = vsub.f32 %v47, %v123
    %v126 = vsub.f32 %v48, %v124
    %v127 = vmul.f32 %v125, %v125
    %v128 = vmul.f32 %v126, %v126
    %v129 = vsel %vm88, %v127, 0.0
    %130 = vadd.xlane.f32.xlu0 %v129
    %v131 = vpop.xlane.xlu0 %130
    %v132 = vsel %vm88, %v128, 0.0
    %133 = vadd.xlane.f32.xlu0 %v132
    %v134 = vpop.xlane.xlu0 %133
    %v135 = vmul.f32 %v131, %v101
    %v136 = vmul.f32 %v134, %v101
    %v137 = vrot.slane %v135, 4
    %v138 = vadd.f32 %v135, %v137
    %v139 = vrot.slane %v138, 2
    %v140 = vadd.f32 %v138, %v139
    %v141 = vrot.slane %v140, 1
    %v142 = vadd.f32 %v140, %v141
    %v143 = vrot.slane %v136, 4
    %v144 = vadd.f32 %v136, %v143
    %v145 = vrot.slane %v144, 2
    %v146 = vadd.f32 %v144, %v145
    %v147 = vrot.slane %v146, 1
    %v148 = vadd.f32 %v146, %v147
    %v149 = vmul.f32 %v142, %v122
    %v150 = vmul.f32 %v148, %v122
    %v151 = vadd.f32 %v149, 1e-05
    %v152 = vadd.f32 %v150, 1e-05
    %v153 = vrsqrt.pop %v151
    %v154 = vmul.f32 %v153, %v151
    %v155 = vmul.f32 %v154, %v153
    %v156 = vmul.f32 0.5, %v155
    %v157 = vsub.f32 1.5, %v156
    %v158 = vmul.f32 %v153, %v157
    %vm159 = vweird.f32 %v151
    %vm160 = vweird.f32 %v153
    %vm161 = vmor %vm159, %vm160
    %v162 = vsel %vm161, %v153, %v158
    %v163 = vrsqrt.pop %v152
    %v164 = vmul.f32 %v163, %v152
    %v165 = vmul.f32 %v164, %v163
    %v166 = vmul.f32 0.5, %v165
    %v167 = vsub.f32 1.5, %v166
    %v168 = vmul.f32 %v163, %v167
    %vm169 = vweird.f32 %v152
    %vm170 = vweird.f32 %v163
    %vm171 = vmor %vm169, %vm170
    %v172 = vsel %vm171, %v163, %v168
    %v173 = vmul.f32 %v125, %v162
    %v174 = vmul.f32 %v126, %v172
    %v176 = vsel %vm88, %v173, 0
    %v179 = vsel %vm88, %v174, 0
    %181 = vmatpush.msra.mxu0 0.0
    %182 = vmatpush.msra.mxu0 0.0
    %183 = vmatpush.msra.mxu0 0.0
    %184 = vmatpush.msra.mxu0 0.0
    %185 = vmatpush.msra.mxu0 0.0
    %186 = vmatpush.msra.mxu0 0.0
    %187 = vmatpush.msra.mxu0 0.0
    %188 = vmatpush.msra.mxu0 0.0
    %189 = vmatpush.msra.mxu0 0.0
    %190 = vmatpush.msra.mxu0 0.0
    %191 = vmatpush.msra.mxu0 0.0
    %192 = vmatpush.msra.mxu0 0.0
    %193 = vmatpush.msra.mxu0 %v52
    %194 = vmatpush.msra.mxu0 %v51
    %195 = vmatpush.msra.mxu0 %v50
    %196 = vmatpush.msra.mxu0 %v49
    %197 = vmatmul.f32.gmra.mxu0 %v176
    %v198 = vpop.f32.mrf.mxu0
    %v199 = vadd.f32 0.0, %v198
    %200 = vmatmul.f32.gmra.mxu0 %v179
    %v201 = vpop.f32.mrf.mxu0
    %v202 = vadd.f32 0.0, %v201
    %203 = vdwg.mxu0
    %206 = vrot.lane.b32.xlu0 %v199, 120
    %v207 = vpop.permute.xlu0 %206
    %208 = vrot.lane.b32.xlu0 %v202, 120
    %v209 = vpop.permute.xlu0 %208
    %210 = vrot.lane.b32.xlu0 %v199, 112
    %v211 = vpop.permute.xlu0 %210
    %212 = vrot.lane.b32.xlu0 %v202, 112
    %v213 = vpop.permute.xlu0 %212
    %214 = vrot.lane.b32.xlu0 %v199, 104
    %v215 = vpop.permute.xlu0 %214
    %216 = vrot.lane.b32.xlu0 %v202, 104
    %v217 = vpop.permute.xlu0 %216
    %218 = vrot.lane.b32.xlu0 %v199, 96
    %v219 = vpop.permute.xlu0 %218
    %vm220 = vcmask 64512
    %v221 = vsel %vm220, %v199, 0
    %v223 = vsel %vm220, %v219, 0
    %225 = vmatpush.xpose.msra.mxu0 0.0
    %226 = vmatpush.xpose.msra.mxu0 0.0
    %227 = vmatpush.xpose.msra.mxu0 0.0
    %228 = vmatpush.xpose.msra.mxu0 0.0
    %229 = vmatpush.xpose.msra.mxu0 0.0
    %230 = vmatpush.xpose.msra.mxu0 0.0
    %231 = vmatpush.xpose.msra.mxu0 0.0
    %232 = vmatpush.xpose.msra.mxu0 0.0
    %233 = vmatpush.xpose.msra.mxu0 0.0
    %234 = vmatpush.xpose.msra.mxu0 0.0
    %235 = vmatpush.xpose.msra.mxu0 0.0
    %236 = vmatpush.xpose.msra.mxu0 0.0
    %237 = vmatpush.xpose.msra.mxu0 0.0
    %238 = vmatpush.xpose.msra.mxu0 0.0
    %239 = vmatpush.xpose.msra.mxu0 0.0
    %240 = vmatpush.xpose.msra.mxu0 %v223
    %241 = vmatmul.f32.gmra.mxu0 %v221
    %v242 = vpop.f32.mrf.mxu0
    %v243 = vadd.f32 0.0, %v242
    %244 = vdwg.mxu0
    %245 = vrot.lane.b32.xlu0 %v202, 96
    %v246 = vpop.permute.xlu0 %245
    %v247 = vsel %vm220, %v202, 0
    %v249 = vsel %vm220, %v246, 0
    %251 = vmatpush.xpose.msra.mxu0 0.0
    %252 = vmatpush.xpose.msra.mxu0 0.0
    %253 = vmatpush.xpose.msra.mxu0 0.0
    %254 = vmatpush.xpose.msra.mxu0 0.0
    %255 = vmatpush.xpose.msra.mxu0 0.0
    %256 = vmatpush.xpose.msra.mxu0 0.0
    %257 = vmatpush.xpose.msra.mxu0 0.0
    %258 = vmatpush.xpose.msra.mxu0 0.0
    %259 = vmatpush.xpose.msra.mxu0 0.0
    %260 = vmatpush.xpose.msra.mxu0 0.0
    %261 = vmatpush.xpose.msra.mxu0 0.0
    %262 = vmatpush.xpose.msra.mxu0 0.0
    %263 = vmatpush.xpose.msra.mxu0 0.0
    %264 = vmatpush.xpose.msra.mxu0 0.0
    %265 = vmatpush.xpose.msra.mxu0 0.0
    %266 = vmatpush.xpose.msra.mxu0 %v249
    %267 = vmatmul.f32.gmra.mxu0 %v247
    %v268 = vpop.f32.mrf.mxu0
    %v269 = vadd.f32 0.0, %v268
    %270 = vdwg.mxu0
    %271 = vrot.lane.b32.xlu0 %v207, 96
    %v272 = vpop.permute.xlu0 %271
    %v273 = vsel %vm220, %v207, 0
    %v275 = vsel %vm220, %v272, 0
    %277 = vmatpush.xpose.msra.mxu0 0.0
    %278 = vmatpush.xpose.msra.mxu0 0.0
    %279 = vmatpush.xpose.msra.mxu0 0.0
    %280 = vmatpush.xpose.msra.mxu0 0.0
    %281 = vmatpush.xpose.msra.mxu0 0.0
    %282 = vmatpush.xpose.msra.mxu0 0.0
    %283 = vmatpush.xpose.msra.mxu0 0.0
    %284 = vmatpush.xpose.msra.mxu0 0.0
    %285 = vmatpush.xpose.msra.mxu0 0.0
    %286 = vmatpush.xpose.msra.mxu0 0.0
    %287 = vmatpush.xpose.msra.mxu0 0.0
    %288 = vmatpush.xpose.msra.mxu0 0.0
    %289 = vmatpush.xpose.msra.mxu0 0.0
    %290 = vmatpush.xpose.msra.mxu0 0.0
    %291 = vmatpush.xpose.msra.mxu0 0.0
    %292 = vmatpush.xpose.msra.mxu0 %v275
    %293 = vmatmul.f32.gmra.mxu0 %v273
    %v294 = vpop.f32.mrf.mxu0
    %v295 = vadd.f32 0.0, %v294
    %296 = vdwg.mxu0
    %297 = vrot.lane.b32.xlu0 %v209, 96
    %v298 = vpop.permute.xlu0 %297
    %v299 = vsel %vm220, %v209, 0
    %v301 = vsel %vm220, %v298, 0
    %303 = vmatpush.xpose.msra.mxu0 0.0
    %304 = vmatpush.xpose.msra.mxu0 0.0
    %305 = vmatpush.xpose.msra.mxu0 0.0
    %306 = vmatpush.xpose.msra.mxu0 0.0
    %307 = vmatpush.xpose.msra.mxu0 0.0
    %308 = vmatpush.xpose.msra.mxu0 0.0
    %309 = vmatpush.xpose.msra.mxu0 0.0
    %310 = vmatpush.xpose.msra.mxu0 0.0
    %311 = vmatpush.xpose.msra.mxu0 0.0
    %312 = vmatpush.xpose.msra.mxu0 0.0
    %313 = vmatpush.xpose.msra.mxu0 0.0
    %314 = vmatpush.xpose.msra.mxu0 0.0
    %315 = vmatpush.xpose.msra.mxu0 0.0
    %316 = vmatpush.xpose.msra.mxu0 0.0
    %317 = vmatpush.xpose.msra.mxu0 0.0
    %318 = vmatpush.xpose.msra.mxu0 %v301
    %319 = vmatmul.f32.gmra.mxu0 %v299
    %v320 = vpop.f32.mrf.mxu0
    %v321 = vadd.f32 0.0, %v320
    %322 = vdwg.mxu0
    %323 = vrot.lane.b32.xlu0 %v211, 96
    %v324 = vpop.permute.xlu0 %323
    %v325 = vsel %vm220, %v211, 0
    %v327 = vsel %vm220, %v324, 0
    %329 = vmatpush.xpose.msra.mxu0 0.0
    %330 = vmatpush.xpose.msra.mxu0 0.0
    %331 = vmatpush.xpose.msra.mxu0 0.0
    %332 = vmatpush.xpose.msra.mxu0 0.0
    %333 = vmatpush.xpose.msra.mxu0 0.0
    %334 = vmatpush.xpose.msra.mxu0 0.0
    %335 = vmatpush.xpose.msra.mxu0 0.0
    %336 = vmatpush.xpose.msra.mxu0 0.0
    %337 = vmatpush.xpose.msra.mxu0 0.0
    %338 = vmatpush.xpose.msra.mxu0 0.0
    %339 = vmatpush.xpose.msra.mxu0 0.0
    %340 = vmatpush.xpose.msra.mxu0 0.0
    %341 = vmatpush.xpose.msra.mxu0 0.0
    %342 = vmatpush.xpose.msra.mxu0 0.0
    %343 = vmatpush.xpose.msra.mxu0 0.0
    %344 = vmatpush.xpose.msra.mxu0 %v327
    %345 = vmatmul.f32.gmra.mxu0 %v325
    %v346 = vpop.f32.mrf.mxu0
    %v347 = vadd.f32 0.0, %v346
    %348 = vdwg.mxu0
    %349 = vrot.lane.b32.xlu0 %v213, 96
    %v350 = vpop.permute.xlu0 %349
    %v351 = vsel %vm220, %v213, 0
    %v353 = vsel %vm220, %v350, 0
    %355 = vmatpush.xpose.msra.mxu0 0.0
    %356 = vmatpush.xpose.msra.mxu0 0.0
    %357 = vmatpush.xpose.msra.mxu0 0.0
    %358 = vmatpush.xpose.msra.mxu0 0.0
    %359 = vmatpush.xpose.msra.mxu0 0.0
    %360 = vmatpush.xpose.msra.mxu0 0.0
    %361 = vmatpush.xpose.msra.mxu0 0.0
    %362 = vmatpush.xpose.msra.mxu0 0.0
    %363 = vmatpush.xpose.msra.mxu0 0.0
    %364 = vmatpush.xpose.msra.mxu0 0.0
    %365 = vmatpush.xpose.msra.mxu0 0.0
    %366 = vmatpush.xpose.msra.mxu0 0.0
    %367 = vmatpush.xpose.msra.mxu0 0.0
    %368 = vmatpush.xpose.msra.mxu0 0.0
    %369 = vmatpush.xpose.msra.mxu0 0.0
    %370 = vmatpush.xpose.msra.mxu0 %v353
    %371 = vmatmul.f32.gmra.mxu0 %v351
    %v372 = vpop.f32.mrf.mxu0
    %v373 = vadd.f32 0.0, %v372
    %374 = vdwg.mxu0
    %375 = vrot.lane.b32.xlu0 %v215, 96
    %v376 = vpop.permute.xlu0 %375
    %v377 = vsel %vm220, %v215, 0
    %v379 = vsel %vm220, %v376, 0
    %381 = vmatpush.xpose.msra.mxu0 0.0
    %382 = vmatpush.xpose.msra.mxu0 0.0
    %383 = vmatpush.xpose.msra.mxu0 0.0
    %384 = vmatpush.xpose.msra.mxu0 0.0
    %385 = vmatpush.xpose.msra.mxu0 0.0
    %386 = vmatpush.xpose.msra.mxu0 0.0
    %387 = vmatpush.xpose.msra.mxu0 0.0
    %388 = vmatpush.xpose.msra.mxu0 0.0
    %389 = vmatpush.xpose.msra.mxu0 0.0
    %390 = vmatpush.xpose.msra.mxu0 0.0
    %391 = vmatpush.xpose.msra.mxu0 0.0
    %392 = vmatpush.xpose.msra.mxu0 0.0
    %393 = vmatpush.xpose.msra.mxu0 0.0
    %394 = vmatpush.xpose.msra.mxu0 0.0
    %395 = vmatpush.xpose.msra.mxu0 0.0
    %396 = vmatpush.xpose.msra.mxu0 %v379
    %397 = vmatmul.f32.gmra.mxu0 %v377
    %v398 = vpop.f32.mrf.mxu0
    %v399 = vadd.f32 0.0, %v398
    %400 = vdwg.mxu0
    %401 = vrot.lane.b32.xlu0 %v217, 96
    %v402 = vpop.permute.xlu0 %401
    %v403 = vsel %vm220, %v217, 0
    %v405 = vsel %vm220, %v402, 0
    %407 = vmatpush.xpose.msra.mxu0 0.0
    %408 = vmatpush.xpose.msra.mxu0 0.0
    %409 = vmatpush.xpose.msra.mxu0 0.0
    %410 = vmatpush.xpose.msra.mxu0 0.0
    %411 = vmatpush.xpose.msra.mxu0 0.0
    %412 = vmatpush.xpose.msra.mxu0 0.0
    %413 = vmatpush.xpose.msra.mxu0 0.0
    %414 = vmatpush.xpose.msra.mxu0 0.0
    %415 = vmatpush.xpose.msra.mxu0 0.0
    %416 = vmatpush.xpose.msra.mxu0 0.0
    %417 = vmatpush.xpose.msra.mxu0 0.0
    %418 = vmatpush.xpose.msra.mxu0 0.0
    %419 = vmatpush.xpose.msra.mxu0 0.0
    %420 = vmatpush.xpose.msra.mxu0 0.0
    %421 = vmatpush.xpose.msra.mxu0 0.0
    %422 = vmatpush.xpose.msra.mxu0 %v405
    %423 = vmatmul.f32.gmra.mxu0 %v403
    %v424 = vpop.f32.mrf.mxu0
    %v425 = vadd.f32 0.0, %v424
    %426 = vdwg.mxu0
    %v427 = vmul.f32 %v243, 0.35355338
    %v428 = vmul.f32 %v269, 0.35355338
    %v429 = vmul.f32 %v295, 0.35355338
    %v430 = vmul.f32 %v321, 0.35355338
    %v431 = vmul.f32 %v347, 0.35355338
    %v432 = vmul.f32 %v373, 0.35355338
    %v433 = vmul.f32 %v399, 0.35355338
    %v434 = vmul.f32 %v425, 0.35355338
    %v435 = vsel %vm87, 1, 0
    %vm436 = vcmp.eq.s32.totalorder %v435, 1
    %v437 = vsel %vm436, -inf, %v427
    %v438 = vsel %vm436, -inf, %v428
    %v439 = vsel %vm436, -inf, %v429
    %v440 = vsel %vm436, -inf, %v430
    %v441 = vsel %vm436, -inf, %v431
    %v442 = vsel %vm436, -inf, %v432
    %v443 = vsel %vm436, -inf, %v433
    %v444 = vsel %vm436, -inf, %v434
    %v445 = vsel %vm220, %v437, -inf
    %446 = vmax.xlane.f32.xlu0 %v445
    %v447 = vpop.xlane.xlu0 %446
    %v448 = vsel %vm220, %v438, -inf
    %449 = vmax.xlane.f32.xlu0 %v448
    %v450 = vpop.xlane.xlu0 %449
    %v451 = vsel %vm220, %v439, -inf
    %452 = vmax.xlane.f32.xlu0 %v451
    %v453 = vpop.xlane.xlu0 %452
    %v454 = vsel %vm220, %v440, -inf
    %455 = vmax.xlane.f32.xlu0 %v454
    %v456 = vpop.xlane.xlu0 %455
    %v457 = vsel %vm220, %v441, -inf
    %458 = vmax.xlane.f32.xlu0 %v457
    %v459 = vpop.xlane.xlu0 %458
    %v460 = vsel %vm220, %v442, -inf
    %461 = vmax.xlane.f32.xlu0 %v460
    %v462 = vpop.xlane.xlu0 %461
    %v463 = vsel %vm220, %v443, -inf
    %464 = vmax.xlane.f32.xlu0 %v463
    %v465 = vpop.xlane.xlu0 %464
    %v466 = vsel %vm220, %v444, -inf
    %467 = vmax.xlane.f32.xlu0 %v466
    %v468 = vpop.xlane.xlu0 %467
    %v469 = vsub.f32 %v437, %v447
    %v470 = vsub.f32 %v438, %v450
    %v471 = vsub.f32 %v439, %v453
    %v472 = vsub.f32 %v440, %v456
    %v473 = vsub.f32 %v441, %v459
    %v474 = vsub.f32 %v442, %v462
    %v475 = vsub.f32 %v443, %v465
    %v476 = vsub.f32 %v444, %v468
    %v477 = vmul.f32 %v469, 1.442695
    %v478 = vpow.pop %v477
    %v479 = vmul.f32 %v470, 1.442695
    %v480 = vpow.pop %v479
    %v481 = vmul.f32 %v471, 1.442695
    %v482 = vpow.pop %v481
    %v483 = vmul.f32 %v472, 1.442695
    %v484 = vpow.pop %v483
    %v485 = vmul.f32 %v473, 1.442695
    %v486 = vpow.pop %v485
    %v487 = vmul.f32 %v474, 1.442695
    %v488 = vpow.pop %v487
    %v489 = vmul.f32 %v475, 1.442695
    %v490 = vpow.pop %v489
    %v491 = vmul.f32 %v476, 1.442695
    %v492 = vpow.pop %v491
    %v493 = vsel %vm220, %v478, 0.0
    %494 = vadd.xlane.f32.xlu0 %v493
    %v495 = vpop.xlane.xlu0 %494
    %v496 = vsel %vm220, %v480, 0.0
    %497 = vadd.xlane.f32.xlu0 %v496
    %v498 = vpop.xlane.xlu0 %497
    %v499 = vsel %vm220, %v482, 0.0
    %500 = vadd.xlane.f32.xlu0 %v499
    %v501 = vpop.xlane.xlu0 %500
    %v502 = vsel %vm220, %v484, 0.0
    %503 = vadd.xlane.f32.xlu0 %v502
    %v504 = vpop.xlane.xlu0 %503
    %v505 = vsel %vm220, %v486, 0.0
    %506 = vadd.xlane.f32.xlu0 %v505
    %v507 = vpop.xlane.xlu0 %506
    %v508 = vsel %vm220, %v488, 0.0
    %509 = vadd.xlane.f32.xlu0 %v508
    %v510 = vpop.xlane.xlu0 %509
    %v511 = vsel %vm220, %v490, 0.0
    %512 = vadd.xlane.f32.xlu0 %v511
    %v513 = vpop.xlane.xlu0 %512
    %v514 = vsel %vm220, %v492, 0.0
    %515 = vadd.xlane.f32.xlu0 %v514
    %v516 = vpop.xlane.xlu0 %515
    %v517 = vrcp.pop %v495
    %v518 = vrcp.pop %v498
    %v519 = vrcp.pop %v501
    %v520 = vrcp.pop %v504
    %v521 = vrcp.pop %v507
    %v522 = vrcp.pop %v510
    %v523 = vrcp.pop %v513
    %v524 = vrcp.pop %v516
    %v525 = vmul.f32 %v495, %v517
    %v526 = vmul.f32 %v498, %v518
    %v527 = vmul.f32 %v501, %v519
    %v528 = vmul.f32 %v504, %v520
    %v529 = vmul.f32 %v507, %v521
    %v530 = vmul.f32 %v510, %v522
    %v531 = vmul.f32 %v513, %v523
    %v532 = vmul.f32 %v516, %v524
    %v533 = vsub.f32 2.0, %v525
    %v534 = vsub.f32 2.0, %v526
    %v535 = vsub.f32 2.0, %v527
    %v536 = vsub.f32 2.0, %v528
    %v537 = vsub.f32 2.0, %v529
    %v538 = vsub.f32 2.0, %v530
    %v539 = vsub.f32 2.0, %v531
    %v540 = vsub.f32 2.0, %v532
    %v541 = vmul.f32 %v517, %v533
    %v542 = vmul.f32 %v518, %v534
    %v543 = vmul.f32 %v519, %v535
    %v544 = vmul.f32 %v520, %v536
    %v545 = vmul.f32 %v521, %v537
    %v546 = vmul.f32 %v522, %v538
    %v547 = vmul.f32 %v523, %v539
    %v548 = vmul.f32 %v524, %v540
    %v549 = vmul.f32 %v478, %v541
    %v550 = vmul.f32 %v480, %v542
    %v551 = vmul.f32 %v482, %v543
    %v552 = vmul.f32 %v484, %v544
    %v553 = vmul.f32 %v486, %v545
    %v554 = vmul.f32 %v488, %v546
    %v555 = vmul.f32 %v490, %v547
    %v556 = vmul.f32 %v492, %v548
    %557 = vrot.lane.b32.xlu0 %v199, 64
    %v558 = vpop.permute.xlu0 %557
    %v561 = vsel %vm220, %v549, 0
    %563 = vmatpush.msra.mxu0 0.0
    %564 = vmatpush.msra.mxu0 0.0
    %565 = vmatpush.msra.mxu0 0.0
    %566 = vmatpush.msra.mxu0 0.0
    %567 = vmatpush.msra.mxu0 0.0
    %568 = vmatpush.msra.mxu0 0.0
    %569 = vmatpush.msra.mxu0 0.0
    %570 = vmatpush.msra.mxu0 0.0
    %571 = vmatpush.msra.mxu0 0.0
    %572 = vmatpush.msra.mxu0 0.0
    %573 = vmatpush.msra.mxu0 0.0
    %574 = vmatpush.msra.mxu0 0.0
    %575 = vmatpush.msra.mxu0 0.0
    %576 = vmatpush.msra.mxu0 0.0
    %577 = vmatpush.msra.mxu0 0.0
    %578 = vmatpush.msra.mxu0 %v558
    %579 = vmatmul.f32.gmra.mxu0 %v561
    %v580 = vpop.f32.mrf.mxu0
    %v581 = vadd.f32 0.0, %v580
    %582 = vdwg.mxu0
    %583 = vrot.lane.b32.xlu0 %v202, 64
    %v584 = vpop.permute.xlu0 %583
    %v587 = vsel %vm220, %v550, 0
    %589 = vmatpush.msra.mxu0 0.0
    %590 = vmatpush.msra.mxu0 0.0
    %591 = vmatpush.msra.mxu0 0.0
    %592 = vmatpush.msra.mxu0 0.0
    %593 = vmatpush.msra.mxu0 0.0
    %594 = vmatpush.msra.mxu0 0.0
    %595 = vmatpush.msra.mxu0 0.0
    %596 = vmatpush.msra.mxu0 0.0
    %597 = vmatpush.msra.mxu0 0.0
    %598 = vmatpush.msra.mxu0 0.0
    %599 = vmatpush.msra.mxu0 0.0
    %600 = vmatpush.msra.mxu0 0.0
    %601 = vmatpush.msra.mxu0 0.0
    %602 = vmatpush.msra.mxu0 0.0
    %603 = vmatpush.msra.mxu0 0.0
    %604 = vmatpush.msra.mxu0 %v584
    %605 = vmatmul.f32.gmra.mxu0 %v587
    %v606 = vpop.f32.mrf.mxu0
    %v607 = vadd.f32 0.0, %v606
    %608 = vdwg.mxu0
    %609 = vrot.lane.b32.xlu0 %v207, 64
    %v610 = vpop.permute.xlu0 %609
    %v613 = vsel %vm220, %v551, 0
    %615 = vmatpush.msra.mxu0 0.0
    %616 = vmatpush.msra.mxu0 0.0
    %617 = vmatpush.msra.mxu0 0.0
    %618 = vmatpush.msra.mxu0 0.0
    %619 = vmatpush.msra.mxu0 0.0
    %620 = vmatpush.msra.mxu0 0.0
    %621 = vmatpush.msra.mxu0 0.0
    %622 = vmatpush.msra.mxu0 0.0
    %623 = vmatpush.msra.mxu0 0.0
    %624 = vmatpush.msra.mxu0 0.0
    %625 = vmatpush.msra.mxu0 0.0
    %626 = vmatpush.msra.mxu0 0.0
    %627 = vmatpush.msra.mxu0 0.0
    %628 = vmatpush.msra.mxu0 0.0
    %629 = vmatpush.msra.mxu0 0.0
    %630 = vmatpush.msra.mxu0 %v610
    %631 = vmatmul.f32.gmra.mxu0 %v613
    %v632 = vpop.f32.mrf.mxu0
    %v633 = vadd.f32 0.0, %v632
    %634 = vdwg.mxu0
    %635 = vrot.lane.b32.xlu0 %v209, 64
    %v636 = vpop.permute.xlu0 %635
    %v639 = vsel %vm220, %v552, 0
    %641 = vmatpush.msra.mxu0 0.0
    %642 = vmatpush.msra.mxu0 0.0
    %643 = vmatpush.msra.mxu0 0.0
    %644 = vmatpush.msra.mxu0 0.0
    %645 = vmatpush.msra.mxu0 0.0
    %646 = vmatpush.msra.mxu0 0.0
    %647 = vmatpush.msra.mxu0 0.0
    %648 = vmatpush.msra.mxu0 0.0
    %649 = vmatpush.msra.mxu0 0.0
    %650 = vmatpush.msra.mxu0 0.0
    %651 = vmatpush.msra.mxu0 0.0
    %652 = vmatpush.msra.mxu0 0.0
    %653 = vmatpush.msra.mxu0 0.0
    %654 = vmatpush.msra.mxu0 0.0
    %655 = vmatpush.msra.mxu0 0.0
    %656 = vmatpush.msra.mxu0 %v636
    %657 = vmatmul.f32.gmra.mxu0 %v639
    %v658 = vpop.f32.mrf.mxu0
    %v659 = vadd.f32 0.0, %v658
    %660 = vdwg.mxu0
    %661 = vrot.lane.b32.xlu0 %v211, 64
    %v662 = vpop.permute.xlu0 %661
    %v665 = vsel %vm220, %v553, 0
    %667 = vmatpush.msra.mxu0 0.0
    %668 = vmatpush.msra.mxu0 0.0
    %669 = vmatpush.msra.mxu0 0.0
    %670 = vmatpush.msra.mxu0 0.0
    %671 = vmatpush.msra.mxu0 0.0
    %672 = vmatpush.msra.mxu0 0.0
    %673 = vmatpush.msra.mxu0 0.0
    %674 = vmatpush.msra.mxu0 0.0
    %675 = vmatpush.msra.mxu0 0.0
    %676 = vmatpush.msra.mxu0 0.0
    %677 = vmatpush.msra.mxu0 0.0
    %678 = vmatpush.msra.mxu0 0.0
    %679 = vmatpush.msra.mxu0 0.0
    %680 = vmatpush.msra.mxu0 0.0
    %681 = vmatpush.msra.mxu0 0.0
    %682 = vmatpush.msra.mxu0 %v662
    %683 = vmatmul.f32.gmra.mxu0 %v665
    %v684 = vpop.f32.mrf.mxu0
    %v685 = vadd.f32 0.0, %v684
    %686 = vdwg.mxu0
    %687 = vrot.lane.b32.xlu0 %v213, 64
    %v688 = vpop.permute.xlu0 %687
    %v691 = vsel %vm220, %v554, 0
    %693 = vmatpush.msra.mxu0 0.0
    %694 = vmatpush.msra.mxu0 0.0
    %695 = vmatpush.msra.mxu0 0.0
    %696 = vmatpush.msra.mxu0 0.0
    %697 = vmatpush.msra.mxu0 0.0
    %698 = vmatpush.msra.mxu0 0.0
    %699 = vmatpush.msra.mxu0 0.0
    %700 = vmatpush.msra.mxu0 0.0
    %701 = vmatpush.msra.mxu0 0.0
    %702 = vmatpush.msra.mxu0 0.0
    %703 = vmatpush.msra.mxu0 0.0
    %704 = vmatpush.msra.mxu0 0.0
    %705 = vmatpush.msra.mxu0 0.0
    %706 = vmatpush.msra.mxu0 0.0
    %707 = vmatpush.msra.mxu0 0.0
    %708 = vmatpush.msra.mxu0 %v688
    %709 = vmatmul.f32.gmra.mxu0 %v691
    %v710 = vpop.f32.mrf.mxu0
    %v711 = vadd.f32 0.0, %v710
    %712 = vdwg.mxu0
    %713 = vrot.lane.b32.xlu0 %v215, 64
    %v714 = vpop.permute.xlu0 %713
    %v717 = vsel %vm220, %v555, 0
    %719 = vmatpush.msra.mxu0 0.0
    %720 = vmatpush.msra.mxu0 0.0
    %721 = vmatpush.msra.mxu0 0.0
    %722 = vmatpush.msra.mxu0 0.0
    %723 = vmatpush.msra.mxu0 0.0
    %724 = vmatpush.msra.mxu0 0.0
    %725 = vmatpush.msra.mxu0 0.0
    %726 = vmatpush.msra.mxu0 0.0
    %727 = vmatpush.msra.mxu0 0.0
    %728 = vmatpush.msra.mxu0 0.0
    %729 = vmatpush.msra.mxu0 0.0
    %730 = vmatpush.msra.mxu0 0.0
    %731 = vmatpush.msra.mxu0 0.0
    %732 = vmatpush.msra.mxu0 0.0
    %733 = vmatpush.msra.mxu0 0.0
    %734 = vmatpush.msra.mxu0 %v714
    %735 = vmatmul.f32.gmra.mxu0 %v717
    %v736 = vpop.f32.mrf.mxu0
    %v737 = vadd.f32 0.0, %v736
    %738 = vdwg.mxu0
    %739 = vrot.lane.b32.xlu0 %v217, 64
    %v740 = vpop.permute.xlu0 %739
    %v743 = vsel %vm220, %v556, 0
    %745 = vmatpush.msra.mxu0 0.0
    %746 = vmatpush.msra.mxu0 0.0
    %747 = vmatpush.msra.mxu0 0.0
    %748 = vmatpush.msra.mxu0 0.0
    %749 = vmatpush.msra.mxu0 0.0
    %750 = vmatpush.msra.mxu0 0.0
    %751 = vmatpush.msra.mxu0 0.0
    %752 = vmatpush.msra.mxu0 0.0
    %753 = vmatpush.msra.mxu0 0.0
    %754 = vmatpush.msra.mxu0 0.0
    %755 = vmatpush.msra.mxu0 0.0
    %756 = vmatpush.msra.mxu0 0.0
    %757 = vmatpush.msra.mxu0 0.0
    %758 = vmatpush.msra.mxu0 0.0
    %759 = vmatpush.msra.mxu0 0.0
    %760 = vmatpush.msra.mxu0 %v740
    %761 = vmatmul.f32.gmra.mxu0 %v743
    %v762 = vpop.f32.mrf.mxu0
    %v763 = vadd.f32 0.0, %v762
    %764 = vdwg.mxu0
    %767 = vrot.lane.b32.xlu0 %v633, 8
    %v768 = vpop.permute.xlu0 %767
    %769 = vrot.lane.b32.xlu0 %v659, 8
    %v770 = vpop.permute.xlu0 %769
    %775 = vrot.lane.b32.xlu0 %v685, 16
    %v776 = vpop.permute.xlu0 %775
    %777 = vrot.lane.b32.xlu0 %v711, 16
    %v778 = vpop.permute.xlu0 %777
    %783 = vrot.lane.b32.xlu0 %v737, 24
    %v784 = vpop.permute.xlu0 %783
    %785 = vrot.lane.b32.xlu0 %v763, 24
    %v786 = vpop.permute.xlu0 %785
    %v789 = vsel %vm220, %v581, %v768
    %v790 = vsel %vm220, %v607, %v770
    %vm791 = vcmask 130048
    %v792 = vsel %vm791, %v789, %v776
    %v793 = vsel %vm791, %v790, %v778
    %vm794 = vcmask 195584
    %v795 = vsel %vm794, %v792, %v784
    %v796 = vsel %vm794, %v793, %v786
    %v798 = vsel %vm88, %v795, 0
    %v801 = vsel %vm88, %v796, 0
    %803 = vmatpush.msra.mxu0 0.0
    %804 = vmatpush.msra.mxu0 0.0
    %805 = vmatpush.msra.mxu0 0.0
    %806 = vmatpush.msra.mxu0 0.0
    %807 = vmatpush.msra.mxu0 0.0
    %808 = vmatpush.msra.mxu0 0.0
    %809 = vmatpush.msra.mxu0 0.0
    %810 = vmatpush.msra.mxu0 0.0
    %811 = vmatpush.msra.mxu0 0.0
    %812 = vmatpush.msra.mxu0 0.0
    %813 = vmatpush.msra.mxu0 0.0
    %814 = vmatpush.msra.mxu0 0.0
    %815 = vmatpush.msra.mxu0 %v56
    %816 = vmatpush.msra.mxu0 %v55
    %817 = vmatpush.msra.mxu0 %v54
    %818 = vmatpush.msra.mxu0 %v53
    %819 = vmatmul.f32.gmra.mxu0 %v798
    %v820 = vpop.f32.mrf.mxu0
    %v821 = vadd.f32 0.0, %v820
    %822 = vmatmul.f32.gmra.mxu0 %v801
    %v823 = vpop.f32.mrf.mxu0
    %v824 = vadd.f32 0.0, %v823
    %825 = vdwg.mxu0
    %v826 = vadd.f32 %v47, %v821
    %v827 = vadd.f32 %v48, %v824
    %v828 = vsel %vm88, %v826, 0.0
    %829 = vadd.xlane.f32.xlu0 %v828
    %v830 = vpop.xlane.xlu0 %829
    %v831 = vsel %vm88, %v827, 0.0
    %832 = vadd.xlane.f32.xlu0 %v831
    %v833 = vpop.xlane.xlu0 %832
    %v834 = vmul.f32 %v830, %v101
    %v835 = vmul.f32 %v833, %v101
    %v836 = vrot.slane %v834, 4
    %v837 = vadd.f32 %v834, %v836
    %v838 = vrot.slane %v837, 2
    %v839 = vadd.f32 %v837, %v838
    %v840 = vrot.slane %v839, 1
    %v841 = vadd.f32 %v839, %v840
    %v842 = vrot.slane %v835, 4
    %v843 = vadd.f32 %v835, %v842
    %v844 = vrot.slane %v843, 2
    %v845 = vadd.f32 %v843, %v844
    %v846 = vrot.slane %v845, 1
    %v847 = vadd.f32 %v845, %v846
    %v848 = vmul.f32 %v841, %v122
    %v849 = vmul.f32 %v847, %v122
    %v850 = vsub.f32 %v826, %v848
    %v851 = vsub.f32 %v827, %v849
    %v852 = vmul.f32 %v850, %v850
    %v853 = vmul.f32 %v851, %v851
    %v854 = vsel %vm88, %v852, 0.0
    %855 = vadd.xlane.f32.xlu0 %v854
    %v856 = vpop.xlane.xlu0 %855
    %v857 = vsel %vm88, %v853, 0.0
    %858 = vadd.xlane.f32.xlu0 %v857
    %v859 = vpop.xlane.xlu0 %858
    %v860 = vmul.f32 %v856, %v101
    %v861 = vmul.f32 %v859, %v101
    %v862 = vrot.slane %v860, 4
    %v863 = vadd.f32 %v860, %v862
    %v864 = vrot.slane %v863, 2
    %v865 = vadd.f32 %v863, %v864
    %v866 = vrot.slane %v865, 1
    %v867 = vadd.f32 %v865, %v866
    %v868 = vrot.slane %v861, 4
    %v869 = vadd.f32 %v861, %v868
    %v870 = vrot.slane %v869, 2
    %v871 = vadd.f32 %v869, %v870
    %v872 = vrot.slane %v871, 1
    %v873 = vadd.f32 %v871, %v872
    %v874 = vmul.f32 %v867, %v122
    %v875 = vmul.f32 %v873, %v122
    %v876 = vadd.f32 %v874, 1e-05
    %v877 = vadd.f32 %v875, 1e-05
    %v878 = vrsqrt.pop %v876
    %v879 = vmul.f32 %v878, %v876
    %v880 = vmul.f32 %v879, %v878
    %v881 = vmul.f32 0.5, %v880
    %v882 = vsub.f32 1.5, %v881
    %v883 = vmul.f32 %v878, %v882
    %vm884 = vweird.f32 %v876
    %vm885 = vweird.f32 %v878
    %vm886 = vmor %vm884, %vm885
    %v887 = vsel %vm886, %v878, %v883
    %v888 = vrsqrt.pop %v877
    %v889 = vmul.f32 %v888, %v877
    %v890 = vmul.f32 %v889, %v888
    %v891 = vmul.f32 0.5, %v890
    %v892 = vsub.f32 1.5, %v891
    %v893 = vmul.f32 %v888, %v892
    %vm894 = vweird.f32 %v877
    %vm895 = vweird.f32 %v888
    %vm896 = vmor %vm894, %vm895
    %v897 = vsel %vm896, %v888, %v893
    %v898 = vmul.f32 %v850, %v887
    %v899 = vmul.f32 %v851, %v897
    %v900 = vsel %vm88, %v44, 0.0
    %901 = vadd.xlane.f32.xlu0 %v900
    %v902 = vpop.xlane.xlu0 %901
    %v903 = vsel %vm88, %v45, 0.0
    %904 = vadd.xlane.f32.xlu0 %v903
    %v905 = vpop.xlane.xlu0 %904
    %v906 = vmul.f32 %v902, %v101
    %v907 = vmul.f32 %v905, %v101
    %v908 = vrot.slane %v906, 4
    %v909 = vadd.f32 %v906, %v908
    %v910 = vrot.slane %v909, 2
    %v911 = vadd.f32 %v909, %v910
    %v912 = vrot.slane %v911, 1
    %v913 = vadd.f32 %v911, %v912
    %v914 = vrot.slane %v907, 4
    %v915 = vadd.f32 %v907, %v914
    %v916 = vrot.slane %v915, 2
    %v917 = vadd.f32 %v915, %v916
    %v918 = vrot.slane %v917, 1
    %v919 = vadd.f32 %v917, %v918
    %v920 = vmul.f32 %v913, %v122
    %v921 = vmul.f32 %v919, %v122
    %v922 = vsub.f32 %v44, %v920
    %v923 = vsub.f32 %v45, %v921
    %v924 = vmul.f32 %v922, %v922
    %v925 = vmul.f32 %v923, %v923
    %v926 = vsel %vm88, %v924, 0.0
    %927 = vadd.xlane.f32.xlu0 %v926
    %v928 = vpop.xlane.xlu0 %927
    %v929 = vsel %vm88, %v925, 0.0
    %930 = vadd.xlane.f32.xlu0 %v929
    %v931 = vpop.xlane.xlu0 %930
    %v932 = vmul.f32 %v928, %v101
    %v933 = vmul.f32 %v931, %v101
    %v934 = vrot.slane %v932, 4
    %v935 = vadd.f32 %v932, %v934
    %v936 = vrot.slane %v935, 2
    %v937 = vadd.f32 %v935, %v936
    %v938 = vrot.slane %v937, 1
    %v939 = vadd.f32 %v937, %v938
    %v940 = vrot.slane %v933, 4
    %v941 = vadd.f32 %v933, %v940
    %v942 = vrot.slane %v941, 2
    %v943 = vadd.f32 %v941, %v942
    %v944 = vrot.slane %v943, 1
    %v945 = vadd.f32 %v943, %v944
    %v946 = vmul.f32 %v939, %v122
    %v947 = vmul.f32 %v945, %v122
    %v948 = vadd.f32 %v946, 1e-05
    %v949 = vadd.f32 %v947, 1e-05
    %v950 = vrsqrt.pop %v948
    %v951 = vmul.f32 %v950, %v948
    %v952 = vmul.f32 %v951, %v950
    %v953 = vmul.f32 0.5, %v952
    %v954 = vsub.f32 1.5, %v953
    %v955 = vmul.f32 %v950, %v954
    %vm956 = vweird.f32 %v948
    %vm957 = vweird.f32 %v950
    %vm958 = vmor %vm956, %vm957
    %v959 = vsel %vm958, %v950, %v955
    %v960 = vrsqrt.pop %v949
    %v961 = vmul.f32 %v960, %v949
    %v962 = vmul.f32 %v961, %v960
    %v963 = vmul.f32 0.5, %v962
    %v964 = vsub.f32 1.5, %v963
    %v965 = vmul.f32 %v960, %v964
    %vm966 = vweird.f32 %v949
    %vm967 = vweird.f32 %v960
    %vm968 = vmor %vm966, %vm967
    %v969 = vsel %vm968, %v960, %v965
    %v970 = vmul.f32 %v922, %v959
    %v971 = vmul.f32 %v923, %v969
    %v973 = vsel %vm88, %v898, 0
    %v976 = vsel %vm88, %v899, 0
    %978 = vmatpush.msra.mxu0 0.0
    %979 = vmatpush.msra.mxu0 0.0
    %980 = vmatpush.msra.mxu0 0.0
    %981 = vmatpush.msra.mxu0 0.0
    %982 = vmatpush.msra.mxu0 0.0
    %983 = vmatpush.msra.mxu0 0.0
    %984 = vmatpush.msra.mxu0 0.0
    %985 = vmatpush.msra.mxu0 0.0
    %986 = vmatpush.msra.mxu0 0.0
    %987 = vmatpush.msra.mxu0 0.0
    %988 = vmatpush.msra.mxu0 0.0
    %989 = vmatpush.msra.mxu0 0.0
    %990 = vmatpush.msra.mxu0 %v60
    %991 = vmatpush.msra.mxu0 %v59
    %992 = vmatpush.msra.mxu0 %v58
    %993 = vmatpush.msra.mxu0 %v57
    %994 = vmatmul.f32.gmra.mxu0 %v973
    %v995 = vpop.f32.mrf.mxu0
    %v996 = vadd.f32 0.0, %v995
    %997 = vmatmul.f32.gmra.mxu0 %v976
    %v998 = vpop.f32.mrf.mxu0
    %v999 = vadd.f32 0.0, %v998
    %1000 = vdwg.mxu0
    %v1002 = vsel %vm88, %v970, 0
    %v1005 = vsel %vm88, %v971, 0
    %1007 = vmatpush.msra.mxu0 0.0
    %1008 = vmatpush.msra.mxu0 0.0
    %1009 = vmatpush.msra.mxu0 0.0
    %1010 = vmatpush.msra.mxu0 0.0
    %1011 = vmatpush.msra.mxu0 0.0
    %1012 = vmatpush.msra.mxu0 0.0
    %1013 = vmatpush.msra.mxu0 0.0
    %1014 = vmatpush.msra.mxu0 0.0
    %1015 = vmatpush.msra.mxu0 0.0
    %1016 = vmatpush.msra.mxu0 0.0
    %1017 = vmatpush.msra.mxu0 0.0
    %1018 = vmatpush.msra.mxu0 0.0
    %1019 = vmatpush.msra.mxu0 %v64
    %1020 = vmatpush.msra.mxu0 %v63
    %1021 = vmatpush.msra.mxu0 %v62
    %1022 = vmatpush.msra.mxu0 %v61
    %1023 = vmatmul.f32.gmra.mxu0 %v1002
    %v1024 = vpop.f32.mrf.mxu0
    %v1025 = vadd.f32 0.0, %v1024
    %1026 = vmatmul.f32.gmra.mxu0 %v1005
    %v1027 = vpop.f32.mrf.mxu0
    %v1028 = vadd.f32 0.0, %v1027
    %1029 = vdwg.mxu0
    %1032 = vrot.lane.b32.xlu0 %v996, 120
    %v1033 = vpop.permute.xlu0 %1032
    %1034 = vrot.lane.b32.xlu0 %v999, 120
    %v1035 = vpop.permute.xlu0 %1034
    %1036 = vrot.lane.b32.xlu0 %v996, 112
    %v1037 = vpop.permute.xlu0 %1036
    %1038 = vrot.lane.b32.xlu0 %v999, 112
    %v1039 = vpop.permute.xlu0 %1038
    %1040 = vrot.lane.b32.xlu0 %v996, 104
    %v1041 = vpop.permute.xlu0 %1040
    %1042 = vrot.lane.b32.xlu0 %v999, 104
    %v1043 = vpop.permute.xlu0 %1042
    %1046 = vrot.lane.b32.xlu0 %v1025, 120
    %v1047 = vpop.permute.xlu0 %1046
    %1048 = vrot.lane.b32.xlu0 %v1028, 120
    %v1049 = vpop.permute.xlu0 %1048
    %1050 = vrot.lane.b32.xlu0 %v1025, 112
    %v1051 = vpop.permute.xlu0 %1050
    %1052 = vrot.lane.b32.xlu0 %v1028, 112
    %v1053 = vpop.permute.xlu0 %1052
    %1054 = vrot.lane.b32.xlu0 %v1025, 104
    %v1055 = vpop.permute.xlu0 %1054
    %1056 = vrot.lane.b32.xlu0 %v1028, 104
    %v1057 = vpop.permute.xlu0 %1056
    %v1058 = vsel %vm220, %v996, 0
    %v1060 = vsel %vm220, %v1025, 0
    %1062 = vmatpush.xpose.msra.mxu0 0.0
    %1063 = vmatpush.xpose.msra.mxu0 0.0
    %1064 = vmatpush.xpose.msra.mxu0 0.0
    %1065 = vmatpush.xpose.msra.mxu0 0.0
    %1066 = vmatpush.xpose.msra.mxu0 0.0
    %1067 = vmatpush.xpose.msra.mxu0 0.0
    %1068 = vmatpush.xpose.msra.mxu0 0.0
    %1069 = vmatpush.xpose.msra.mxu0 0.0
    %1070 = vmatpush.xpose.msra.mxu0 0.0
    %1071 = vmatpush.xpose.msra.mxu0 0.0
    %1072 = vmatpush.xpose.msra.mxu0 0.0
    %1073 = vmatpush.xpose.msra.mxu0 0.0
    %1074 = vmatpush.xpose.msra.mxu0 0.0
    %1075 = vmatpush.xpose.msra.mxu0 0.0
    %1076 = vmatpush.xpose.msra.mxu0 0.0
    %1077 = vmatpush.xpose.msra.mxu0 %v1060
    %1078 = vmatmul.f32.gmra.mxu0 %v1058
    %v1079 = vpop.f32.mrf.mxu0
    %v1080 = vadd.f32 0.0, %v1079
    %1081 = vdwg.mxu0
    %v1082 = vsel %vm220, %v999, 0
    %v1084 = vsel %vm220, %v1028, 0
    %1086 = vmatpush.xpose.msra.mxu0 0.0
    %1087 = vmatpush.xpose.msra.mxu0 0.0
    %1088 = vmatpush.xpose.msra.mxu0 0.0
    %1089 = vmatpush.xpose.msra.mxu0 0.0
    %1090 = vmatpush.xpose.msra.mxu0 0.0
    %1091 = vmatpush.xpose.msra.mxu0 0.0
    %1092 = vmatpush.xpose.msra.mxu0 0.0
    %1093 = vmatpush.xpose.msra.mxu0 0.0
    %1094 = vmatpush.xpose.msra.mxu0 0.0
    %1095 = vmatpush.xpose.msra.mxu0 0.0
    %1096 = vmatpush.xpose.msra.mxu0 0.0
    %1097 = vmatpush.xpose.msra.mxu0 0.0
    %1098 = vmatpush.xpose.msra.mxu0 0.0
    %1099 = vmatpush.xpose.msra.mxu0 0.0
    %1100 = vmatpush.xpose.msra.mxu0 0.0
    %1101 = vmatpush.xpose.msra.mxu0 %v1084
    %1102 = vmatmul.f32.gmra.mxu0 %v1082
    %v1103 = vpop.f32.mrf.mxu0
    %v1104 = vadd.f32 0.0, %v1103
    %1105 = vdwg.mxu0
    %v1106 = vsel %vm220, %v1033, 0
    %v1108 = vsel %vm220, %v1047, 0
    %1110 = vmatpush.xpose.msra.mxu0 0.0
    %1111 = vmatpush.xpose.msra.mxu0 0.0
    %1112 = vmatpush.xpose.msra.mxu0 0.0
    %1113 = vmatpush.xpose.msra.mxu0 0.0
    %1114 = vmatpush.xpose.msra.mxu0 0.0
    %1115 = vmatpush.xpose.msra.mxu0 0.0
    %1116 = vmatpush.xpose.msra.mxu0 0.0
    %1117 = vmatpush.xpose.msra.mxu0 0.0
    %1118 = vmatpush.xpose.msra.mxu0 0.0
    %1119 = vmatpush.xpose.msra.mxu0 0.0
    %1120 = vmatpush.xpose.msra.mxu0 0.0
    %1121 = vmatpush.xpose.msra.mxu0 0.0
    %1122 = vmatpush.xpose.msra.mxu0 0.0
    %1123 = vmatpush.xpose.msra.mxu0 0.0
    %1124 = vmatpush.xpose.msra.mxu0 0.0
    %1125 = vmatpush.xpose.msra.mxu0 %v1108
    %1126 = vmatmul.f32.gmra.mxu0 %v1106
    %v1127 = vpop.f32.mrf.mxu0
    %v1128 = vadd.f32 0.0, %v1127
    %1129 = vdwg.mxu0
    %v1130 = vsel %vm220, %v1035, 0
    %v1132 = vsel %vm220, %v1049, 0
    %1134 = vmatpush.xpose.msra.mxu0 0.0
    %1135 = vmatpush.xpose.msra.mxu0 0.0
    %1136 = vmatpush.xpose.msra.mxu0 0.0
    %1137 = vmatpush.xpose.msra.mxu0 0.0
    %1138 = vmatpush.xpose.msra.mxu0 0.0
    %1139 = vmatpush.xpose.msra.mxu0 0.0
    %1140 = vmatpush.xpose.msra.mxu0 0.0
    %1141 = vmatpush.xpose.msra.mxu0 0.0
    %1142 = vmatpush.xpose.msra.mxu0 0.0
    %1143 = vmatpush.xpose.msra.mxu0 0.0
    %1144 = vmatpush.xpose.msra.mxu0 0.0
    %1145 = vmatpush.xpose.msra.mxu0 0.0
    %1146 = vmatpush.xpose.msra.mxu0 0.0
    %1147 = vmatpush.xpose.msra.mxu0 0.0
    %1148 = vmatpush.xpose.msra.mxu0 0.0
    %1149 = vmatpush.xpose.msra.mxu0 %v1132
    %1150 = vmatmul.f32.gmra.mxu0 %v1130
    %v1151 = vpop.f32.mrf.mxu0
    %v1152 = vadd.f32 0.0, %v1151
    %1153 = vdwg.mxu0
    %v1154 = vsel %vm220, %v1037, 0
    %v1156 = vsel %vm220, %v1051, 0
    %1158 = vmatpush.xpose.msra.mxu0 0.0
    %1159 = vmatpush.xpose.msra.mxu0 0.0
    %1160 = vmatpush.xpose.msra.mxu0 0.0
    %1161 = vmatpush.xpose.msra.mxu0 0.0
    %1162 = vmatpush.xpose.msra.mxu0 0.0
    %1163 = vmatpush.xpose.msra.mxu0 0.0
    %1164 = vmatpush.xpose.msra.mxu0 0.0
    %1165 = vmatpush.xpose.msra.mxu0 0.0
    %1166 = vmatpush.xpose.msra.mxu0 0.0
    %1167 = vmatpush.xpose.msra.mxu0 0.0
    %1168 = vmatpush.xpose.msra.mxu0 0.0
    %1169 = vmatpush.xpose.msra.mxu0 0.0
    %1170 = vmatpush.xpose.msra.mxu0 0.0
    %1171 = vmatpush.xpose.msra.mxu0 0.0
    %1172 = vmatpush.xpose.msra.mxu0 0.0
    %1173 = vmatpush.xpose.msra.mxu0 %v1156
    %1174 = vmatmul.f32.gmra.mxu0 %v1154
    %v1175 = vpop.f32.mrf.mxu0
    %v1176 = vadd.f32 0.0, %v1175
    %1177 = vdwg.mxu0
    %v1178 = vsel %vm220, %v1039, 0
    %v1180 = vsel %vm220, %v1053, 0
    %1182 = vmatpush.xpose.msra.mxu0 0.0
    %1183 = vmatpush.xpose.msra.mxu0 0.0
    %1184 = vmatpush.xpose.msra.mxu0 0.0
    %1185 = vmatpush.xpose.msra.mxu0 0.0
    %1186 = vmatpush.xpose.msra.mxu0 0.0
    %1187 = vmatpush.xpose.msra.mxu0 0.0
    %1188 = vmatpush.xpose.msra.mxu0 0.0
    %1189 = vmatpush.xpose.msra.mxu0 0.0
    %1190 = vmatpush.xpose.msra.mxu0 0.0
    %1191 = vmatpush.xpose.msra.mxu0 0.0
    %1192 = vmatpush.xpose.msra.mxu0 0.0
    %1193 = vmatpush.xpose.msra.mxu0 0.0
    %1194 = vmatpush.xpose.msra.mxu0 0.0
    %1195 = vmatpush.xpose.msra.mxu0 0.0
    %1196 = vmatpush.xpose.msra.mxu0 0.0
    %1197 = vmatpush.xpose.msra.mxu0 %v1180
    %1198 = vmatmul.f32.gmra.mxu0 %v1178
    %v1199 = vpop.f32.mrf.mxu0
    %v1200 = vadd.f32 0.0, %v1199
    %1201 = vdwg.mxu0
    %v1202 = vsel %vm220, %v1041, 0
    %v1204 = vsel %vm220, %v1055, 0
    %1206 = vmatpush.xpose.msra.mxu0 0.0
    %1207 = vmatpush.xpose.msra.mxu0 0.0
    %1208 = vmatpush.xpose.msra.mxu0 0.0
    %1209 = vmatpush.xpose.msra.mxu0 0.0
    %1210 = vmatpush.xpose.msra.mxu0 0.0
    %1211 = vmatpush.xpose.msra.mxu0 0.0
    %1212 = vmatpush.xpose.msra.mxu0 0.0
    %1213 = vmatpush.xpose.msra.mxu0 0.0
    %1214 = vmatpush.xpose.msra.mxu0 0.0
    %1215 = vmatpush.xpose.msra.mxu0 0.0
    %1216 = vmatpush.xpose.msra.mxu0 0.0
    %1217 = vmatpush.xpose.msra.mxu0 0.0
    %1218 = vmatpush.xpose.msra.mxu0 0.0
    %1219 = vmatpush.xpose.msra.mxu0 0.0
    %1220 = vmatpush.xpose.msra.mxu0 0.0
    %1221 = vmatpush.xpose.msra.mxu0 %v1204
    %1222 = vmatmul.f32.gmra.mxu0 %v1202
    %v1223 = vpop.f32.mrf.mxu0
    %v1224 = vadd.f32 0.0, %v1223
    %1225 = vdwg.mxu0
    %v1226 = vsel %vm220, %v1043, 0
    %v1228 = vsel %vm220, %v1057, 0
    %1230 = vmatpush.xpose.msra.mxu0 0.0
    %1231 = vmatpush.xpose.msra.mxu0 0.0
    %1232 = vmatpush.xpose.msra.mxu0 0.0
    %1233 = vmatpush.xpose.msra.mxu0 0.0
    %1234 = vmatpush.xpose.msra.mxu0 0.0
    %1235 = vmatpush.xpose.msra.mxu0 0.0
    %1236 = vmatpush.xpose.msra.mxu0 0.0
    %1237 = vmatpush.xpose.msra.mxu0 0.0
    %1238 = vmatpush.xpose.msra.mxu0 0.0
    %1239 = vmatpush.xpose.msra.mxu0 0.0
    %1240 = vmatpush.xpose.msra.mxu0 0.0
    %1241 = vmatpush.xpose.msra.mxu0 0.0
    %1242 = vmatpush.xpose.msra.mxu0 0.0
    %1243 = vmatpush.xpose.msra.mxu0 0.0
    %1244 = vmatpush.xpose.msra.mxu0 0.0
    %1245 = vmatpush.xpose.msra.mxu0 %v1228
    %1246 = vmatmul.f32.gmra.mxu0 %v1226
    %v1247 = vpop.f32.mrf.mxu0
    %v1248 = vadd.f32 0.0, %v1247
    %1249 = vdwg.mxu0
    %v1250 = vmul.f32 %v1080, 0.35355338
    %v1251 = vmul.f32 %v1104, 0.35355338
    %v1252 = vmul.f32 %v1128, 0.35355338
    %v1253 = vmul.f32 %v1152, 0.35355338
    %v1254 = vmul.f32 %v1176, 0.35355338
    %v1255 = vmul.f32 %v1200, 0.35355338
    %v1256 = vmul.f32 %v1224, 0.35355338
    %v1257 = vmul.f32 %v1248, 0.35355338
    %v1258 = vsel %vm220, %v1250, -inf
    %1259 = vmax.xlane.f32.xlu0 %v1258
    %v1260 = vpop.xlane.xlu0 %1259
    %v1261 = vsel %vm220, %v1251, -inf
    %1262 = vmax.xlane.f32.xlu0 %v1261
    %v1263 = vpop.xlane.xlu0 %1262
    %v1264 = vsel %vm220, %v1252, -inf
    %1265 = vmax.xlane.f32.xlu0 %v1264
    %v1266 = vpop.xlane.xlu0 %1265
    %v1267 = vsel %vm220, %v1253, -inf
    %1268 = vmax.xlane.f32.xlu0 %v1267
    %v1269 = vpop.xlane.xlu0 %1268
    %v1270 = vsel %vm220, %v1254, -inf
    %1271 = vmax.xlane.f32.xlu0 %v1270
    %v1272 = vpop.xlane.xlu0 %1271
    %v1273 = vsel %vm220, %v1255, -inf
    %1274 = vmax.xlane.f32.xlu0 %v1273
    %v1275 = vpop.xlane.xlu0 %1274
    %v1276 = vsel %vm220, %v1256, -inf
    %1277 = vmax.xlane.f32.xlu0 %v1276
    %v1278 = vpop.xlane.xlu0 %1277
    %v1279 = vsel %vm220, %v1257, -inf
    %1280 = vmax.xlane.f32.xlu0 %v1279
    %v1281 = vpop.xlane.xlu0 %1280
    %v1282 = vsub.f32 %v1250, %v1260
    %v1283 = vsub.f32 %v1251, %v1263
    %v1284 = vsub.f32 %v1252, %v1266
    %v1285 = vsub.f32 %v1253, %v1269
    %v1286 = vsub.f32 %v1254, %v1272
    %v1287 = vsub.f32 %v1255, %v1275
    %v1288 = vsub.f32 %v1256, %v1278
    %v1289 = vsub.f32 %v1257, %v1281
    %v1290 = vmul.f32 %v1282, 1.442695
    %v1291 = vpow.pop %v1290
    %v1292 = vmul.f32 %v1283, 1.442695
    %v1293 = vpow.pop %v1292
    %v1294 = vmul.f32 %v1284, 1.442695
    %v1295 = vpow.pop %v1294
    %v1296 = vmul.f32 %v1285, 1.442695
    %v1297 = vpow.pop %v1296
    %v1298 = vmul.f32 %v1286, 1.442695
    %v1299 = vpow.pop %v1298
    %v1300 = vmul.f32 %v1287, 1.442695
    %v1301 = vpow.pop %v1300
    %v1302 = vmul.f32 %v1288, 1.442695
    %v1303 = vpow.pop %v1302
    %v1304 = vmul.f32 %v1289, 1.442695
    %v1305 = vpow.pop %v1304
    %v1306 = vsel %vm220, %v1291, 0.0
    %1307 = vadd.xlane.f32.xlu0 %v1306
    %v1308 = vpop.xlane.xlu0 %1307
    %v1309 = vsel %vm220, %v1293, 0.0
    %1310 = vadd.xlane.f32.xlu0 %v1309
    %v1311 = vpop.xlane.xlu0 %1310
    %v1312 = vsel %vm220, %v1295, 0.0
    %1313 = vadd.xlane.f32.xlu0 %v1312
    %v1314 = vpop.xlane.xlu0 %1313
    %v1315 = vsel %vm220, %v1297, 0.0
    %1316 = vadd.xlane.f32.xlu0 %v1315
    %v1317 = vpop.xlane.xlu0 %1316
    %v1318 = vsel %vm220, %v1299, 0.0
    %1319 = vadd.xlane.f32.xlu0 %v1318
    %v1320 = vpop.xlane.xlu0 %1319
    %v1321 = vsel %vm220, %v1301, 0.0
    %1322 = vadd.xlane.f32.xlu0 %v1321
    %v1323 = vpop.xlane.xlu0 %1322
    %v1324 = vsel %vm220, %v1303, 0.0
    %1325 = vadd.xlane.f32.xlu0 %v1324
    %v1326 = vpop.xlane.xlu0 %1325
    %v1327 = vsel %vm220, %v1305, 0.0
    %1328 = vadd.xlane.f32.xlu0 %v1327
    %v1329 = vpop.xlane.xlu0 %1328
    %v1330 = vrcp.pop %v1308
    %v1331 = vrcp.pop %v1311
    %v1332 = vrcp.pop %v1314
    %v1333 = vrcp.pop %v1317
    %v1334 = vrcp.pop %v1320
    %v1335 = vrcp.pop %v1323
    %v1336 = vrcp.pop %v1326
    %v1337 = vrcp.pop %v1329
    %v1338 = vmul.f32 %v1308, %v1330
    %v1339 = vmul.f32 %v1311, %v1331
    %v1340 = vmul.f32 %v1314, %v1332
    %v1341 = vmul.f32 %v1317, %v1333
    %v1342 = vmul.f32 %v1320, %v1334
    %v1343 = vmul.f32 %v1323, %v1335
    %v1344 = vmul.f32 %v1326, %v1336
    %v1345 = vmul.f32 %v1329, %v1337
    %v1346 = vsub.f32 2.0, %v1338
    %v1347 = vsub.f32 2.0, %v1339
    %v1348 = vsub.f32 2.0, %v1340
    %v1349 = vsub.f32 2.0, %v1341
    %v1350 = vsub.f32 2.0, %v1342
    %v1351 = vsub.f32 2.0, %v1343
    %v1352 = vsub.f32 2.0, %v1344
    %v1353 = vsub.f32 2.0, %v1345
    %v1354 = vmul.f32 %v1330, %v1346
    %v1355 = vmul.f32 %v1331, %v1347
    %v1356 = vmul.f32 %v1332, %v1348
    %v1357 = vmul.f32 %v1333, %v1349
    %v1358 = vmul.f32 %v1334, %v1350
    %v1359 = vmul.f32 %v1335, %v1351
    %v1360 = vmul.f32 %v1336, %v1352
    %v1361 = vmul.f32 %v1337, %v1353
    %v1362 = vmul.f32 %v1291, %v1354
    %v1363 = vmul.f32 %v1293, %v1355
    %v1364 = vmul.f32 %v1295, %v1356
    %v1365 = vmul.f32 %v1297, %v1357
    %v1366 = vmul.f32 %v1299, %v1358
    %v1367 = vmul.f32 %v1301, %v1359
    %v1368 = vmul.f32 %v1303, %v1360
    %v1369 = vmul.f32 %v1305, %v1361
    %1370 = vrot.lane.b32.xlu0 %v1025, 96
    %v1371 = vpop.permute.xlu0 %1370
    %v1374 = vsel %vm220, %v1362, 0
    %1376 = vmatpush.msra.mxu0 0.0
    %1377 = vmatpush.msra.mxu0 0.0
    %1378 = vmatpush.msra.mxu0 0.0
    %1379 = vmatpush.msra.mxu0 0.0
    %1380 = vmatpush.msra.mxu0 0.0
    %1381 = vmatpush.msra.mxu0 0.0
    %1382 = vmatpush.msra.mxu0 0.0
    %1383 = vmatpush.msra.mxu0 0.0
    %1384 = vmatpush.msra.mxu0 0.0
    %1385 = vmatpush.msra.mxu0 0.0
    %1386 = vmatpush.msra.mxu0 0.0
    %1387 = vmatpush.msra.mxu0 0.0
    %1388 = vmatpush.msra.mxu0 0.0
    %1389 = vmatpush.msra.mxu0 0.0
    %1390 = vmatpush.msra.mxu0 0.0
    %1391 = vmatpush.msra.mxu0 %v1371
    %1392 = vmatmul.f32.gmra.mxu0 %v1374
    %v1393 = vpop.f32.mrf.mxu0
    %v1394 = vadd.f32 0.0, %v1393
    %1395 = vdwg.mxu0
    %1396 = vrot.lane.b32.xlu0 %v1028, 96
    %v1397 = vpop.permute.xlu0 %1396
    %v1400 = vsel %vm220, %v1363, 0
    %1402 = vmatpush.msra.mxu0 0.0
    %1403 = vmatpush.msra.mxu0 0.0
    %1404 = vmatpush.msra.mxu0 0.0
    %1405 = vmatpush.msra.mxu0 0.0
    %1406 = vmatpush.msra.mxu0 0.0
    %1407 = vmatpush.msra.mxu0 0.0
    %1408 = vmatpush.msra.mxu0 0.0
    %1409 = vmatpush.msra.mxu0 0.0
    %1410 = vmatpush.msra.mxu0 0.0
    %1411 = vmatpush.msra.mxu0 0.0
    %1412 = vmatpush.msra.mxu0 0.0
    %1413 = vmatpush.msra.mxu0 0.0
    %1414 = vmatpush.msra.mxu0 0.0
    %1415 = vmatpush.msra.mxu0 0.0
    %1416 = vmatpush.msra.mxu0 0.0
    %1417 = vmatpush.msra.mxu0 %v1397
    %1418 = vmatmul.f32.gmra.mxu0 %v1400
    %v1419 = vpop.f32.mrf.mxu0
    %v1420 = vadd.f32 0.0, %v1419
    %1421 = vdwg.mxu0
    %1422 = vrot.lane.b32.xlu0 %v1047, 96
    %v1423 = vpop.permute.xlu0 %1422
    %v1426 = vsel %vm220, %v1364, 0
    %1428 = vmatpush.msra.mxu0 0.0
    %1429 = vmatpush.msra.mxu0 0.0
    %1430 = vmatpush.msra.mxu0 0.0
    %1431 = vmatpush.msra.mxu0 0.0
    %1432 = vmatpush.msra.mxu0 0.0
    %1433 = vmatpush.msra.mxu0 0.0
    %1434 = vmatpush.msra.mxu0 0.0
    %1435 = vmatpush.msra.mxu0 0.0
    %1436 = vmatpush.msra.mxu0 0.0
    %1437 = vmatpush.msra.mxu0 0.0
    %1438 = vmatpush.msra.mxu0 0.0
    %1439 = vmatpush.msra.mxu0 0.0
    %1440 = vmatpush.msra.mxu0 0.0
    %1441 = vmatpush.msra.mxu0 0.0
    %1442 = vmatpush.msra.mxu0 0.0
    %1443 = vmatpush.msra.mxu0 %v1423
    %1444 = vmatmul.f32.gmra.mxu0 %v1426
    %v1445 = vpop.f32.mrf.mxu0
    %v1446 = vadd.f32 0.0, %v1445
    %1447 = vdwg.mxu0
    %1448 = vrot.lane.b32.xlu0 %v1049, 96
    %v1449 = vpop.permute.xlu0 %1448
    %v1452 = vsel %vm220, %v1365, 0
    %1454 = vmatpush.msra.mxu0 0.0
    %1455 = vmatpush.msra.mxu0 0.0
    %1456 = vmatpush.msra.mxu0 0.0
    %1457 = vmatpush.msra.mxu0 0.0
    %1458 = vmatpush.msra.mxu0 0.0
    %1459 = vmatpush.msra.mxu0 0.0
    %1460 = vmatpush.msra.mxu0 0.0
    %1461 = vmatpush.msra.mxu0 0.0
    %1462 = vmatpush.msra.mxu0 0.0
    %1463 = vmatpush.msra.mxu0 0.0
    %1464 = vmatpush.msra.mxu0 0.0
    %1465 = vmatpush.msra.mxu0 0.0
    %1466 = vmatpush.msra.mxu0 0.0
    %1467 = vmatpush.msra.mxu0 0.0
    %1468 = vmatpush.msra.mxu0 0.0
    %1469 = vmatpush.msra.mxu0 %v1449
    %1470 = vmatmul.f32.gmra.mxu0 %v1452
    %v1471 = vpop.f32.mrf.mxu0
    %v1472 = vadd.f32 0.0, %v1471
    %1473 = vdwg.mxu0
    %1474 = vrot.lane.b32.xlu0 %v1051, 96
    %v1475 = vpop.permute.xlu0 %1474
    %v1478 = vsel %vm220, %v1366, 0
    %1480 = vmatpush.msra.mxu0 0.0
    %1481 = vmatpush.msra.mxu0 0.0
    %1482 = vmatpush.msra.mxu0 0.0
    %1483 = vmatpush.msra.mxu0 0.0
    %1484 = vmatpush.msra.mxu0 0.0
    %1485 = vmatpush.msra.mxu0 0.0
    %1486 = vmatpush.msra.mxu0 0.0
    %1487 = vmatpush.msra.mxu0 0.0
    %1488 = vmatpush.msra.mxu0 0.0
    %1489 = vmatpush.msra.mxu0 0.0
    %1490 = vmatpush.msra.mxu0 0.0
    %1491 = vmatpush.msra.mxu0 0.0
    %1492 = vmatpush.msra.mxu0 0.0
    %1493 = vmatpush.msra.mxu0 0.0
    %1494 = vmatpush.msra.mxu0 0.0
    %1495 = vmatpush.msra.mxu0 %v1475
    %1496 = vmatmul.f32.gmra.mxu0 %v1478
    %v1497 = vpop.f32.mrf.mxu0
    %v1498 = vadd.f32 0.0, %v1497
    %1499 = vdwg.mxu0
    %1500 = vrot.lane.b32.xlu0 %v1053, 96
    %v1501 = vpop.permute.xlu0 %1500
    %v1504 = vsel %vm220, %v1367, 0
    %1506 = vmatpush.msra.mxu0 0.0
    %1507 = vmatpush.msra.mxu0 0.0
    %1508 = vmatpush.msra.mxu0 0.0
    %1509 = vmatpush.msra.mxu0 0.0
    %1510 = vmatpush.msra.mxu0 0.0
    %1511 = vmatpush.msra.mxu0 0.0
    %1512 = vmatpush.msra.mxu0 0.0
    %1513 = vmatpush.msra.mxu0 0.0
    %1514 = vmatpush.msra.mxu0 0.0
    %1515 = vmatpush.msra.mxu0 0.0
    %1516 = vmatpush.msra.mxu0 0.0
    %1517 = vmatpush.msra.mxu0 0.0
    %1518 = vmatpush.msra.mxu0 0.0
    %1519 = vmatpush.msra.mxu0 0.0
    %1520 = vmatpush.msra.mxu0 0.0
    %1521 = vmatpush.msra.mxu0 %v1501
    %1522 = vmatmul.f32.gmra.mxu0 %v1504
    %v1523 = vpop.f32.mrf.mxu0
    %v1524 = vadd.f32 0.0, %v1523
    %1525 = vdwg.mxu0
    %1526 = vrot.lane.b32.xlu0 %v1055, 96
    %v1527 = vpop.permute.xlu0 %1526
    %v1530 = vsel %vm220, %v1368, 0
    %1532 = vmatpush.msra.mxu0 0.0
    %1533 = vmatpush.msra.mxu0 0.0
    %1534 = vmatpush.msra.mxu0 0.0
    %1535 = vmatpush.msra.mxu0 0.0
    %1536 = vmatpush.msra.mxu0 0.0
    %1537 = vmatpush.msra.mxu0 0.0
    %1538 = vmatpush.msra.mxu0 0.0
    %1539 = vmatpush.msra.mxu0 0.0
    %1540 = vmatpush.msra.mxu0 0.0
    %1541 = vmatpush.msra.mxu0 0.0
    %1542 = vmatpush.msra.mxu0 0.0
    %1543 = vmatpush.msra.mxu0 0.0
    %1544 = vmatpush.msra.mxu0 0.0
    %1545 = vmatpush.msra.mxu0 0.0
    %1546 = vmatpush.msra.mxu0 0.0
    %1547 = vmatpush.msra.mxu0 %v1527
    %1548 = vmatmul.f32.gmra.mxu0 %v1530
    %v1549 = vpop.f32.mrf.mxu0
    %v1550 = vadd.f32 0.0, %v1549
    %1551 = vdwg.mxu0
    %1552 = vrot.lane.b32.xlu0 %v1057, 96
    %v1553 = vpop.permute.xlu0 %1552
    %v1556 = vsel %vm220, %v1369, 0
    %1558 = vmatpush.msra.mxu0 0.0
    %1559 = vmatpush.msra.mxu0 0.0
    %1560 = vmatpush.msra.mxu0 0.0
    %1561 = vmatpush.msra.mxu0 0.0
    %1562 = vmatpush.msra.mxu0 0.0
    %1563 = vmatpush.msra.mxu0 0.0
    %1564 = vmatpush.msra.mxu0 0.0
    %1565 = vmatpush.msra.mxu0 0.0
    %1566 = vmatpush.msra.mxu0 0.0
    %1567 = vmatpush.msra.mxu0 0.0
    %1568 = vmatpush.msra.mxu0 0.0
    %1569 = vmatpush.msra.mxu0 0.0
    %1570 = vmatpush.msra.mxu0 0.0
    %1571 = vmatpush.msra.mxu0 0.0
    %1572 = vmatpush.msra.mxu0 0.0
    %1573 = vmatpush.msra.mxu0 %v1553
    %1574 = vmatmul.f32.gmra.mxu0 %v1556
    %v1575 = vpop.f32.mrf.mxu0
    %v1576 = vadd.f32 0.0, %v1575
    %1577 = vdwg.mxu0
    %1580 = vrot.lane.b32.xlu0 %v1446, 8
    %v1581 = vpop.permute.xlu0 %1580
    %1582 = vrot.lane.b32.xlu0 %v1472, 8
    %v1583 = vpop.permute.xlu0 %1582
    %1588 = vrot.lane.b32.xlu0 %v1498, 16
    %v1589 = vpop.permute.xlu0 %1588
    %1590 = vrot.lane.b32.xlu0 %v1524, 16
    %v1591 = vpop.permute.xlu0 %1590
    %1596 = vrot.lane.b32.xlu0 %v1550, 24
    %v1597 = vpop.permute.xlu0 %1596
    %1598 = vrot.lane.b32.xlu0 %v1576, 24
    %v1599 = vpop.permute.xlu0 %1598
    %v1602 = vsel %vm220, %v1394, %v1581
    %v1603 = vsel %vm220, %v1420, %v1583
    %v1604 = vsel %vm791, %v1602, %v1589
    %v1605 = vsel %vm791, %v1603, %v1591
    %v1606 = vsel %vm794, %v1604, %v1597
    %v1607 = vsel %vm794, %v1605, %v1599
    %v1609 = vsel %vm88, %v1606, 0
    %v1612 = vsel %vm88, %v1607, 0
    %1614 = vmatpush.msra.mxu0 0.0
    %1615 = vmatpush.msra.mxu0 0.0
    %1616 = vmatpush.msra.mxu0 0.0
    %1617 = vmatpush.msra.mxu0 0.0
    %1618 = vmatpush.msra.mxu0 0.0
    %1619 = vmatpush.msra.mxu0 0.0
    %1620 = vmatpush.msra.mxu0 0.0
    %1621 = vmatpush.msra.mxu0 0.0
    %1622 = vmatpush.msra.mxu0 0.0
    %1623 = vmatpush.msra.mxu0 0.0
    %1624 = vmatpush.msra.mxu0 0.0
    %1625 = vmatpush.msra.mxu0 0.0
    %1626 = vmatpush.msra.mxu0 %v68
    %1627 = vmatpush.msra.mxu0 %v67
    %1628 = vmatpush.msra.mxu0 %v66
    %1629 = vmatpush.msra.mxu0 %v65
    %1630 = vmatmul.f32.gmra.mxu0 %v1609
    %v1631 = vpop.f32.mrf.mxu0
    %v1632 = vadd.f32 0.0, %v1631
    %1633 = vmatmul.f32.gmra.mxu0 %v1612
    %v1634 = vpop.f32.mrf.mxu0
    %v1635 = vadd.f32 0.0, %v1634
    %1636 = vdwg.mxu0
    %v1637 = vadd.f32 %v826, %v1632
    %v1638 = vadd.f32 %v827, %v1635
    %v1639 = vsel %vm88, %v1637, 0.0
    %1640 = vadd.xlane.f32.xlu0 %v1639
    %v1641 = vpop.xlane.xlu0 %1640
    %v1642 = vsel %vm88, %v1638, 0.0
    %1643 = vadd.xlane.f32.xlu0 %v1642
    %v1644 = vpop.xlane.xlu0 %1643
    %v1645 = vmul.f32 %v1641, %v101
    %v1646 = vmul.f32 %v1644, %v101
    %v1647 = vrot.slane %v1645, 4
    %v1648 = vadd.f32 %v1645, %v1647
    %v1649 = vrot.slane %v1648, 2
    %v1650 = vadd.f32 %v1648, %v1649
    %v1651 = vrot.slane %v1650, 1
    %v1652 = vadd.f32 %v1650, %v1651
    %v1653 = vrot.slane %v1646, 4
    %v1654 = vadd.f32 %v1646, %v1653
    %v1655 = vrot.slane %v1654, 2
    %v1656 = vadd.f32 %v1654, %v1655
    %v1657 = vrot.slane %v1656, 1
    %v1658 = vadd.f32 %v1656, %v1657
    %v1659 = vmul.f32 %v1652, %v122
    %v1660 = vmul.f32 %v1658, %v122
    %v1661 = vsub.f32 %v1637, %v1659
    %v1662 = vsub.f32 %v1638, %v1660
    %v1663 = vmul.f32 %v1661, %v1661
    %v1664 = vmul.f32 %v1662, %v1662
    %v1665 = vsel %vm88, %v1663, 0.0
    %1666 = vadd.xlane.f32.xlu0 %v1665
    %v1667 = vpop.xlane.xlu0 %1666
    %v1668 = vsel %vm88, %v1664, 0.0
    %1669 = vadd.xlane.f32.xlu0 %v1668
    %v1670 = vpop.xlane.xlu0 %1669
    %v1671 = vmul.f32 %v1667, %v101
    %v1672 = vmul.f32 %v1670, %v101
    %v1673 = vrot.slane %v1671, 4
    %v1674 = vadd.f32 %v1671, %v1673
    %v1675 = vrot.slane %v1674, 2
    %v1676 = vadd.f32 %v1674, %v1675
    %v1677 = vrot.slane %v1676, 1
    %v1678 = vadd.f32 %v1676, %v1677
    %v1679 = vrot.slane %v1672, 4
    %v1680 = vadd.f32 %v1672, %v1679
    %v1681 = vrot.slane %v1680, 2
    %v1682 = vadd.f32 %v1680, %v1681
    %v1683 = vrot.slane %v1682, 1
    %v1684 = vadd.f32 %v1682, %v1683
    %v1685 = vmul.f32 %v1678, %v122
    %v1686 = vmul.f32 %v1684, %v122
    %v1687 = vadd.f32 %v1685, 1e-05
    %v1688 = vadd.f32 %v1686, 1e-05
    %v1689 = vrsqrt.pop %v1687
    %v1690 = vmul.f32 %v1689, %v1687
    %v1691 = vmul.f32 %v1690, %v1689
    %v1692 = vmul.f32 0.5, %v1691
    %v1693 = vsub.f32 1.5, %v1692
    %v1694 = vmul.f32 %v1689, %v1693
    %vm1695 = vweird.f32 %v1687
    %vm1696 = vweird.f32 %v1689
    %vm1697 = vmor %vm1695, %vm1696
    %v1698 = vsel %vm1697, %v1689, %v1694
    %v1699 = vrsqrt.pop %v1688
    %v1700 = vmul.f32 %v1699, %v1688
    %v1701 = vmul.f32 %v1700, %v1699
    %v1702 = vmul.f32 0.5, %v1701
    %v1703 = vsub.f32 1.5, %v1702
    %v1704 = vmul.f32 %v1699, %v1703
    %vm1705 = vweird.f32 %v1688
    %vm1706 = vweird.f32 %v1699
    %vm1707 = vmor %vm1705, %vm1706
    %v1708 = vsel %vm1707, %v1699, %v1704
    %v1709 = vmul.f32 %v1661, %v1698
    %v1710 = vmul.f32 %v1662, %v1708
    %v1711 = vperm.slane %v81, 0
    %v1713 = vsel %vm88, %v1709, 0
    %v1716 = vsel %vm88, %v1710, 0
    %1718 = vmatpush.msra.mxu0 0.0
    %1719 = vmatpush.msra.mxu0 0.0
    %1720 = vmatpush.msra.mxu0 0.0
    %1721 = vmatpush.msra.mxu0 0.0
    %1722 = vmatpush.msra.mxu0 0.0
    %1723 = vmatpush.msra.mxu0 0.0
    %1724 = vmatpush.msra.mxu0 0.0
    %1725 = vmatpush.msra.mxu0 0.0
    %1726 = vmatpush.msra.mxu0 0.0
    %1727 = vmatpush.msra.mxu0 0.0
    %1728 = vmatpush.msra.mxu0 0.0
    %1729 = vmatpush.msra.mxu0 0.0
    %1730 = vmatpush.msra.mxu0 %v72
    %1731 = vmatpush.msra.mxu0 %v71
    %1732 = vmatpush.msra.mxu0 %v70
    %1733 = vmatpush.msra.mxu0 %v69
    %1734 = vmatmul.f32.gmra.mxu0 %v1713
    %v1735 = vpop.f32.mrf.mxu0
    %v1736 = vadd.f32 %v1711, %v1735
    %1737 = vmatmul.f32.gmra.mxu0 %v1716
    %v1738 = vpop.f32.mrf.mxu0
    %v1739 = vadd.f32 %v1711, %v1738
    %1740 = vdwg.mxu0
    %v1741 = vmax.f32 %v1736, 0.0
    %v1742 = vmax.f32 %v1739, 0.0
    %v1743 = vperm.slane %v82, 0
    %vm1744 = vcmask 523264
    %v1746 = vsel %vm1744, %v1741, 0
    %v1749 = vsel %vm1744, %v1742, 0
    %1751 = vmatpush.msra.mxu0 0.0
    %1752 = vmatpush.msra.mxu0 0.0
    %1753 = vmatpush.msra.mxu0 0.0
    %1754 = vmatpush.msra.mxu0 0.0
    %1755 = vmatpush.msra.mxu0 0.0
    %1756 = vmatpush.msra.mxu0 0.0
    %1757 = vmatpush.msra.mxu0 0.0
    %1758 = vmatpush.msra.mxu0 0.0
    %1759 = vmatpush.msra.mxu0 %v80
    %1760 = vmatpush.msra.mxu0 %v79
    %1761 = vmatpush.msra.mxu0 %v78
    %1762 = vmatpush.msra.mxu0 %v77
    %1763 = vmatpush.msra.mxu0 %v76
    %1764 = vmatpush.msra.mxu0 %v75
    %1765 = vmatpush.msra.mxu0 %v74
    %1766 = vmatpush.msra.mxu0 %v73
    %1767 = vmatmul.f32.gmra.mxu0 %v1746
    %v1768 = vpop.f32.mrf.mxu0
    %v1769 = vadd.f32 %v1743, %v1768
    %1770 = vmatmul.f32.gmra.mxu0 %v1749
    %v1771 = vpop.f32.mrf.mxu0
    %v1772 = vadd.f32 %v1743, %v1771
    %1773 = vdwg.mxu0
    %v1774 = vadd.f32 %v1637, %v1769
    %v1775 = vadd.f32 %v1638, %v1772
    %1776 = vst.msk [vmem:[#allocation7] sm:$0xff] %vm88, %v1774
    %1777 = vst.msk [vmem:[#allocation7 + $0x8] sm:$0xff] %vm88, %v1775
    // Predicated region
    $region18: #{tpu_custom_call.1} parent=1 // pred_check
      _
    $region19: #{tpu_custom_call.1} parent=1 // pred_check_branch
      %1779 = sbr.rel (0) target = $region21
    $region20: #{tpu_custom_call.1} parent=1 // pred_region
      %1781 = vsyncadd [#allocation4], 0
      %s1782 = sshll.u32 [#allocation7], 4
      %s1783 = int_to_ptr.vmem [resolvable:$true] %s1782
      %s1784 = sshll.u32 %s2, 4
      %s1785 = int_to_ptr.hbm [resolvable:$true] %s1784
      %1790 = dma.vmem_to_hbm [thread:$0]  %s1783, 256, %s1785, [#allocation4], 128, 128, 8
    $region21: #{tpu_custom_call.1} parent=1 // pred_fallthru
      _
    // Predicated region
    $region22: #{tpu_custom_call.1} parent=1 // pred_check
      _
    $region23: #{tpu_custom_call.1} parent=1 // pred_check_branch
      %1792 = sbr.rel (0) target = $region25
    $region24: #{tpu_custom_call.1} parent=1 // pred_region
      %1794 = dma.done [#allocation4], 256
    $region25: #{tpu_custom_call.1} parent=1 // pred_fallthru
      _
    %1795 = vsyncpa [#allocation3], 1
    %1796 = vsyncpa [#allocation6], 1
    %1797 = vsyncpa [#allocation4], 1

</llo_original>
